<compile_context>
chip_gen: v5e
topology: v5e:2x2
jax: 0.10.0
libtpu: 0.0.40
codegen_flags: <defaults>
</compile_context>

<pallas_src>
import jax
import jax.numpy as jnp
from jax.experimental import pallas as pl
from jax.experimental.pallas import tpu as pltpu


def _make_kernel(Cin, Cout, H, W):
    def kernel(x_ref, dw_ref, db_ref, pw_ref, pb_ref, o_ref):
        # x_ref : (Cin, H, W)   VMEM  input plane for one batch element
        # dw_ref: (9, Cin)      SMEM  depthwise 3x3 taps, k = ky*3 + kx
        # db_ref: (Cin,)        SMEM  depthwise bias
        # pw_ref: (Cout, Cin)   SMEM  pointwise weights
        # pb_ref: (Cout,)       SMEM  pointwise bias
        # o_ref : (Cout, H, W)  VMEM  output plane for one batch element
        zrow = jnp.zeros((1, W), jnp.float32)
        zcol = jnp.zeros((H, 1), jnp.float32)

        acc = [None] * Cout  # Cout (H, W) accumulators, kept in vregs/VMEM

        for c in range(Cin):
            xc = x_ref[c].astype(jnp.float32)  # (H, W), W on lanes

            # Row-shifted windows (zero outside the image):
            #   ky=0 needs in[y-1], ky=1 needs in[y], ky=2 needs in[y+1]
            r_up = jnp.concatenate([zrow, xc[: H - 1, :]], axis=0)
            r_dn = jnp.concatenate([xc[1:, :], zrow], axis=0)
            rows = (r_up, xc, r_dn)

            d = None  # depthwise result for channel c
            for ky in range(3):
                xr = rows[ky]
                # Column-shifted windows (zero outside the image):
                #   kx=0 needs in[x-1], kx=1 needs in[x], kx=2 needs in[x+1]
                c_left = jnp.concatenate([zcol, xr[:, : W - 1]], axis=1)
                c_right = jnp.concatenate([xr[:, 1:], zcol], axis=1)
                cols = (c_left, xr, c_right)
                for kx in range(3):
                    tap = dw_ref[ky * 3 + kx, c]  # scalar from SMEM
                    term = cols[kx] * tap
                    d = term if d is None else d + term
            d = d + db_ref[c]

            # Fused pointwise conv on the VPU: out[co] += pw[co, c] * d
            for co in range(Cout):
                term = d * pw_ref[co, c]
                acc[co] = term if acc[co] is None else acc[co] + term

        for co in range(Cout):
            o_ref[co] = (acc[co] + pb_ref[co]).astype(o_ref.dtype)

    return kernel


def csdn_tem_forward(x_nchw, dw, db, pw, pb):
    """x_nchw: (N, Cin, H, W) float32.
    dw: (Cin, 1, 3, 3), db: (Cin,), pw: (Cout, Cin, 1, 1), pb: (Cout,)
    (PyTorch Conv2d parameter shapes). Returns (N, Cout, H, W)."""
    N, Cin, H, W = x_nchw.shape
    Cout = pw.shape[0]

    # Repack weights for scalar reads in SMEM.
    dw_k = jnp.transpose(dw[:, 0, :, :].reshape(Cin, 9), (1, 0))  # (9, Cin)
    pw_k = pw[:, :, 0, 0]                                         # (Cout, Cin)

    kernel = _make_kernel(Cin, Cout, H, W)
    smem_spec = pl.BlockSpec(memory_space=pltpu.MemorySpace.SMEM)

    out = pl.pallas_call(
        kernel,
        out_shape=jax.ShapeDtypeStruct((N, Cout, H, W), x_nchw.dtype),
        grid_spec=pltpu.PrefetchScalarGridSpec(
            num_scalar_prefetch=0,
            grid=(N,),
            in_specs=[
                pl.BlockSpec((None, Cin, H, W), lambda n: (n, 0, 0, 0)),
                smem_spec,  # dw  (9, Cin)
                smem_spec,  # db  (Cin,)
                smem_spec,  # pw  (Cout, Cin)
                smem_spec,  # pb  (Cout,)
            ],
            out_specs=pl.BlockSpec((None, Cout, H, W), lambda n: (n, 0, 0, 0)),
        ),
        compiler_params=pltpu.CompilerParams(
            dimension_semantics=("parallel",),
            vmem_limit_bytes=32 * 1024 * 1024,
        ),
    )(x_nchw, dw_k, db, pw_k, pb)
    return out


def _reference(x_nchw, dw, db, pw, pb):
    # Plain-JAX reference (matches PyTorch grouped conv semantics).
    Cin = x_nchw.shape[1]
    out = jax.lax.conv_general_dilated(
        x_nchw, dw, window_strides=(1, 1), padding=((1, 1), (1, 1)),
        dimension_numbers=("NCHW", "OIHW", "NCHW"), feature_group_count=Cin)
    out = out + db[None, :, None, None]
    out = jax.lax.conv_general_dilated(
        out, pw, window_strides=(1, 1), padding="VALID",
        dimension_numbers=("NCHW", "OIHW", "NCHW"))
    return out + pb[None, :, None, None]


if __name__ == "__main__":
    key = jax.random.PRNGKey(0)
    N, Cin, Cout, H, W = 2, 4, 8, 16, 16

    k1, k2, k3, k4, k5 = jax.random.split(key, 5)
    x = jax.random.normal(k1, (N, Cin, H, W), dtype=jnp.float32)
    # Deterministic synthetic parameters (PyTorch Conv2d param shapes).
    dw = jax.random.normal(k2, (Cin, 1, 3, 3), dtype=jnp.float32) * 0.2
    db = jax.random.normal(k3, (Cin,), dtype=jnp.float32) * 0.1
    pw = jax.random.normal(k4, (Cout, Cin, 1, 1), dtype=jnp.float32) * 0.2
    pb = jax.random.normal(k5, (Cout,), dtype=jnp.float32) * 0.1

    out = csdn_tem_forward(x, dw, db, pw, pb)
    out = jax.block_until_ready(out)

    ref = jax.block_until_ready(_reference(x, dw, db, pw, pb))
    assert out.shape == (N, Cout, H, W)
    assert jnp.allclose(out, ref, atol=1e-4, rtol=1e-4), "mismatch vs reference"

    print("KERNEL_OK")
</pallas_src>

<mosaic_0001>
module attributes {stable_mosaic.version = 11 : i64} {
  func.func @kernel(%arg0: i32, %arg1: memref<1x4x16x16xf32, #tpu.memory_space<vmem>>, %arg2: memref<9x4xf32, #tpu.memory_space<smem>>, %arg3: memref<4xf32, #tpu.memory_space<smem>>, %arg4: memref<8x4xf32, #tpu.memory_space<smem>>, %arg5: memref<8xf32, #tpu.memory_space<smem>>, %arg6: memref<1x8x16x16xf32, #tpu.memory_space<vmem>>) attributes {dimension_semantics = [#tpu.dimension_semantics<parallel>], iteration_bounds = array<i64: 2>, scalar_prefetch = 0 : i64, scratch_operands = 0 : i64, tpu.core_type = #tpu.core_type<tc>, window_params = [{transform_indices = @transform_0, window_bounds = array<i64: 1, 4, 16, 16>}, {transform_indices = @transform_1, window_bounds = array<i64: 9, 4>}, {transform_indices = @transform_2, window_bounds = array<i64: 4>}, {transform_indices = @transform_3, window_bounds = array<i64: 8, 4>}, {transform_indices = @transform_4, window_bounds = array<i64: 8>}, {transform_indices = @transform_5, window_bounds = array<i64: 1, 8, 16, 16>}]} {
    %cst = arith.constant 0.000000e+00 : f32
    %0 = vector.broadcast %cst : f32 to vector<1x16xf32>
    %cst_0 = arith.constant 0.000000e+00 : f32
    %1 = vector.broadcast %cst_0 : f32 to vector<16x1xf32>
    %c0 = arith.constant 0 : index
    %c0_1 = arith.constant 0 : index
    %c0_2 = arith.constant 0 : index
    %c0_3 = arith.constant 0 : index
    %2 = vector.load %arg1[%c0, %c0_1, %c0_2, %c0_3] : memref<1x4x16x16xf32, #tpu.memory_space<vmem>>, vector<1x1x16x16xf32>
    %3 = vector.shape_cast %2 : vector<1x1x16x16xf32> to vector<16x16xf32>
    %4 = vector.extract_strided_slice %3 {offsets = [0, 0], sizes = [15, 16], strides = [1, 1]} : vector<16x16xf32> to vector<15x16xf32>
    %5 = tpu.concatenate %0, %4 in 0 : vector<1x16xf32>, vector<15x16xf32> -> vector<16x16xf32>
    %6 = vector.extract_strided_slice %3 {offsets = [1, 0], sizes = [15, 16], strides = [1, 1]} : vector<16x16xf32> to vector<15x16xf32>
    %7 = tpu.concatenate %6, %0 in 0 : vector<15x16xf32>, vector<1x16xf32> -> vector<16x16xf32>
    %8 = vector.extract_strided_slice %5 {offsets = [0, 0], sizes = [16, 15], strides = [1, 1]} : vector<16x16xf32> to vector<16x15xf32>
    %9 = tpu.concatenate %1, %8 in 1 : vector<16x1xf32>, vector<16x15xf32> -> vector<16x16xf32>
    %10 = vector.extract_strided_slice %5 {offsets = [0, 1], sizes = [16, 15], strides = [1, 1]} : vector<16x16xf32> to vector<16x15xf32>
    %11 = tpu.concatenate %10, %1 in 1 : vector<16x15xf32>, vector<16x1xf32> -> vector<16x16xf32>
    %c0_4 = arith.constant 0 : index
    %c0_5 = arith.constant 0 : index
    %12 = memref.load %arg2[%c0_4, %c0_5] : memref<9x4xf32, #tpu.memory_space<smem>>
    %13 = vector.broadcast %12 : f32 to vector<16x16xf32>
    %14 = arith.mulf %9, %13 : vector<16x16xf32>
    %c1 = arith.constant 1 : index
    %c0_6 = arith.constant 0 : index
    %15 = memref.load %arg2[%c1, %c0_6] : memref<9x4xf32, #tpu.memory_space<smem>>
    %16 = vector.broadcast %15 : f32 to vector<16x16xf32>
    %17 = arith.mulf %5, %16 : vector<16x16xf32>
    %18 = arith.addf %14, %17 : vector<16x16xf32>
    %c2 = arith.constant 2 : index
    %c0_7 = arith.constant 0 : index
    %19 = memref.load %arg2[%c2, %c0_7] : memref<9x4xf32, #tpu.memory_space<smem>>
    %20 = vector.broadcast %19 : f32 to vector<16x16xf32>
    %21 = arith.mulf %11, %20 : vector<16x16xf32>
    %22 = arith.addf %18, %21 : vector<16x16xf32>
    %23 = vector.extract_strided_slice %3 {offsets = [0, 0], sizes = [16, 15], strides = [1, 1]} : vector<16x16xf32> to vector<16x15xf32>
    %24 = tpu.concatenate %1, %23 in 1 : vector<16x1xf32>, vector<16x15xf32> -> vector<16x16xf32>
    %25 = vector.extract_strided_slice %3 {offsets = [0, 1], sizes = [16, 15], strides = [1, 1]} : vector<16x16xf32> to vector<16x15xf32>
    %26 = tpu.concatenate %25, %1 in 1 : vector<16x15xf32>, vector<16x1xf32> -> vector<16x16xf32>
    %c3 = arith.constant 3 : index
    %c0_8 = arith.constant 0 : index
    %27 = memref.load %arg2[%c3, %c0_8] : memref<9x4xf32, #tpu.memory_space<smem>>
    %28 = vector.broadcast %27 : f32 to vector<16x16xf32>
    %29 = arith.mulf %24, %28 : vector<16x16xf32>
    %30 = arith.addf %22, %29 : vector<16x16xf32>
    %c4 = arith.constant 4 : index
    %c0_9 = arith.constant 0 : index
    %31 = memref.load %arg2[%c4, %c0_9] : memref<9x4xf32, #tpu.memory_space<smem>>
    %32 = vector.broadcast %31 : f32 to vector<16x16xf32>
    %33 = arith.mulf %3, %32 : vector<16x16xf32>
    %34 = arith.addf %30, %33 : vector<16x16xf32>
    %c5 = arith.constant 5 : index
    %c0_10 = arith.constant 0 : index
    %35 = memref.load %arg2[%c5, %c0_10] : memref<9x4xf32, #tpu.memory_space<smem>>
    %36 = vector.broadcast %35 : f32 to vector<16x16xf32>
    %37 = arith.mulf %26, %36 : vector<16x16xf32>
    %38 = arith.addf %34, %37 : vector<16x16xf32>
    %39 = vector.extract_strided_slice %7 {offsets = [0, 0], sizes = [16, 15], strides = [1, 1]} : vector<16x16xf32> to vector<16x15xf32>
    %40 = tpu.concatenate %1, %39 in 1 : vector<16x1xf32>, vector<16x15xf32> -> vector<16x16xf32>
    %41 = vector.extract_strided_slice %7 {offsets = [0, 1], sizes = [16, 15], strides = [1, 1]} : vector<16x16xf32> to vector<16x15xf32>
    %42 = tpu.concatenate %41, %1 in 1 : vector<16x15xf32>, vector<16x1xf32> -> vector<16x16xf32>
    %c6 = arith.constant 6 : index
    %c0_11 = arith.constant 0 : index
    %43 = memref.load %arg2[%c6, %c0_11] : memref<9x4xf32, #tpu.memory_space<smem>>
    %44 = vector.broadcast %43 : f32 to vector<16x16xf32>
    %45 = arith.mulf %40, %44 : vector<16x16xf32>
    %46 = arith.addf %38, %45 : vector<16x16xf32>
    %c7 = arith.constant 7 : index
    %c0_12 = arith.constant 0 : index
    %47 = memref.load %arg2[%c7, %c0_12] : memref<9x4xf32, #tpu.memory_space<smem>>
    %48 = vector.broadcast %47 : f32 to vector<16x16xf32>
    %49 = arith.mulf %7, %48 : vector<16x16xf32>
    %50 = arith.addf %46, %49 : vector<16x16xf32>
    %c8 = arith.constant 8 : index
    %c0_13 = arith.constant 0 : index
    %51 = memref.load %arg2[%c8, %c0_13] : memref<9x4xf32, #tpu.memory_space<smem>>
    %52 = vector.broadcast %51 : f32 to vector<16x16xf32>
    %53 = arith.mulf %42, %52 : vector<16x16xf32>
    %54 = arith.addf %50, %53 : vector<16x16xf32>
    %c0_14 = arith.constant 0 : index
    %55 = memref.load %arg3[%c0_14] : memref<4xf32, #tpu.memory_space<smem>>
    %56 = vector.broadcast %55 : f32 to vector<16x16xf32>
    %57 = arith.addf %54, %56 : vector<16x16xf32>
    %c0_15 = arith.constant 0 : index
    %c0_16 = arith.constant 0 : index
    %58 = memref.load %arg4[%c0_15, %c0_16] : memref<8x4xf32, #tpu.memory_space<smem>>
    %59 = vector.broadcast %58 : f32 to vector<16x16xf32>
    %60 = arith.mulf %57, %59 : vector<16x16xf32>
    %c1_17 = arith.constant 1 : index
    %c0_18 = arith.constant 0 : index
    %61 = memref.load %arg4[%c1_17, %c0_18] : memref<8x4xf32, #tpu.memory_space<smem>>
    %62 = vector.broadcast %61 : f32 to vector<16x16xf32>
    %63 = arith.mulf %57, %62 : vector<16x16xf32>
    %c2_19 = arith.constant 2 : index
    %c0_20 = arith.constant 0 : index
    %64 = memref.load %arg4[%c2_19, %c0_20] : memref<8x4xf32, #tpu.memory_space<smem>>
    %65 = vector.broadcast %64 : f32 to vector<16x16xf32>
    %66 = arith.mulf %57, %65 : vector<16x16xf32>
    %c3_21 = arith.constant 3 : index
    %c0_22 = arith.constant 0 : index
    %67 = memref.load %arg4[%c3_21, %c0_22] : memref<8x4xf32, #tpu.memory_space<smem>>
    %68 = vector.broadcast %67 : f32 to vector<16x16xf32>
    %69 = arith.mulf %57, %68 : vector<16x16xf32>
    %c4_23 = arith.constant 4 : index
    %c0_24 = arith.constant 0 : index
    %70 = memref.load %arg4[%c4_23, %c0_24] : memref<8x4xf32, #tpu.memory_space<smem>>
    %71 = vector.broadcast %70 : f32 to vector<16x16xf32>
    %72 = arith.mulf %57, %71 : vector<16x16xf32>
    %c5_25 = arith.constant 5 : index
    %c0_26 = arith.constant 0 : index
    %73 = memref.load %arg4[%c5_25, %c0_26] : memref<8x4xf32, #tpu.memory_space<smem>>
    %74 = vector.broadcast %73 : f32 to vector<16x16xf32>
    %75 = arith.mulf %57, %74 : vector<16x16xf32>
    %c6_27 = arith.constant 6 : index
    %c0_28 = arith.constant 0 : index
    %76 = memref.load %arg4[%c6_27, %c0_28] : memref<8x4xf32, #tpu.memory_space<smem>>
    %77 = vector.broadcast %76 : f32 to vector<16x16xf32>
    %78 = arith.mulf %57, %77 : vector<16x16xf32>
    %c7_29 = arith.constant 7 : index
    %c0_30 = arith.constant 0 : index
    %79 = memref.load %arg4[%c7_29, %c0_30] : memref<8x4xf32, #tpu.memory_space<smem>>
    %80 = vector.broadcast %79 : f32 to vector<16x16xf32>
    %81 = arith.mulf %57, %80 : vector<16x16xf32>
    %c0_31 = arith.constant 0 : index
    %c1_32 = arith.constant 1 : index
    %c0_33 = arith.constant 0 : index
    %c0_34 = arith.constant 0 : index
    %82 = vector.load %arg1[%c0_31, %c1_32, %c0_33, %c0_34] : memref<1x4x16x16xf32, #tpu.memory_space<vmem>>, vector<1x1x16x16xf32>
    %83 = vector.shape_cast %82 : vector<1x1x16x16xf32> to vector<16x16xf32>
    %84 = vector.extract_strided_slice %83 {offsets = [0, 0], sizes = [15, 16], strides = [1, 1]} : vector<16x16xf32> to vector<15x16xf32>
    %85 = tpu.concatenate %0, %84 in 0 : vector<1x16xf32>, vector<15x16xf32> -> vector<16x16xf32>
    %86 = vector.extract_strided_slice %83 {offsets = [1, 0], sizes = [15, 16], strides = [1, 1]} : vector<16x16xf32> to vector<15x16xf32>
    %87 = tpu.concatenate %86, %0 in 0 : vector<15x16xf32>, vector<1x16xf32> -> vector<16x16xf32>
    %88 = vector.extract_strided_slice %85 {offsets = [0, 0], sizes = [16, 15], strides = [1, 1]} : vector<16x16xf32> to vector<16x15xf32>
    %89 = tpu.concatenate %1, %88 in 1 : vector<16x1xf32>, vector<16x15xf32> -> vector<16x16xf32>
    %90 = vector.extract_strided_slice %85 {offsets = [0, 1], sizes = [16, 15], strides = [1, 1]} : vector<16x16xf32> to vector<16x15xf32>
    %91 = tpu.concatenate %90, %1 in 1 : vector<16x15xf32>, vector<16x1xf32> -> vector<16x16xf32>
    %c0_35 = arith.constant 0 : index
    %c1_36 = arith.constant 1 : index
    %92 = memref.load %arg2[%c0_35, %c1_36] : memref<9x4xf32, #tpu.memory_space<smem>>
    %93 = vector.broadcast %92 : f32 to vector<16x16xf32>
    %94 = arith.mulf %89, %93 : vector<16x16xf32>
    %c1_37 = arith.constant 1 : index
    %c1_38 = arith.constant 1 : index
    %95 = memref.load %arg2[%c1_37, %c1_38] : memref<9x4xf32, #tpu.memory_space<smem>>
    %96 = vector.broadcast %95 : f32 to vector<16x16xf32>
    %97 = arith.mulf %85, %96 : vector<16x16xf32>
    %98 = arith.addf %94, %97 : vector<16x16xf32>
    %c2_39 = arith.constant 2 : index
    %c1_40 = arith.constant 1 : index
    %99 = memref.load %arg2[%c2_39, %c1_40] : memref<9x4xf32, #tpu.memory_space<smem>>
    %100 = vector.broadcast %99 : f32 to vector<16x16xf32>
    %101 = arith.mulf %91, %100 : vector<16x16xf32>
    %102 = arith.addf %98, %101 : vector<16x16xf32>
    %103 = vector.extract_strided_slice %83 {offsets = [0, 0], sizes = [16, 15], strides = [1, 1]} : vector<16x16xf32> to vector<16x15xf32>
    %104 = tpu.concatenate %1, %103 in 1 : vector<16x1xf32>, vector<16x15xf32> -> vector<16x16xf32>
    %105 = vector.extract_strided_slice %83 {offsets = [0, 1], sizes = [16, 15], strides = [1, 1]} : vector<16x16xf32> to vector<16x15xf32>
    %106 = tpu.concatenate %105, %1 in 1 : vector<16x15xf32>, vector<16x1xf32> -> vector<16x16xf32>
    %c3_41 = arith.constant 3 : index
    %c1_42 = arith.constant 1 : index
    %107 = memref.load %arg2[%c3_41, %c1_42] : memref<9x4xf32, #tpu.memory_space<smem>>
    %108 = vector.broadcast %107 : f32 to vector<16x16xf32>
    %109 = arith.mulf %104, %108 : vector<16x16xf32>
    %110 = arith.addf %102, %109 : vector<16x16xf32>
    %c4_43 = arith.constant 4 : index
    %c1_44 = arith.constant 1 : index
    %111 = memref.load %arg2[%c4_43, %c1_44] : memref<9x4xf32, #tpu.memory_space<smem>>
    %112 = vector.broadcast %111 : f32 to vector<16x16xf32>
    %113 = arith.mulf %83, %112 : vector<16x16xf32>
    %114 = arith.addf %110, %113 : vector<16x16xf32>
    %c5_45 = arith.constant 5 : index
    %c1_46 = arith.constant 1 : index
    %115 = memref.load %arg2[%c5_45, %c1_46] : memref<9x4xf32, #tpu.memory_space<smem>>
    %116 = vector.broadcast %115 : f32 to vector<16x16xf32>
    %117 = arith.mulf %106, %116 : vector<16x16xf32>
    %118 = arith.addf %114, %117 : vector<16x16xf32>
    %119 = vector.extract_strided_slice %87 {offsets = [0, 0], sizes = [16, 15], strides = [1, 1]} : vector<16x16xf32> to vector<16x15xf32>
    %120 = tpu.concatenate %1, %119 in 1 : vector<16x1xf32>, vector<16x15xf32> -> vector<16x16xf32>
    %121 = vector.extract_strided_slice %87 {offsets = [0, 1], sizes = [16, 15], strides = [1, 1]} : vector<16x16xf32> to vector<16x15xf32>
    %122 = tpu.concatenate %121, %1 in 1 : vector<16x15xf32>, vector<16x1xf32> -> vector<16x16xf32>
    %c6_47 = arith.constant 6 : index
    %c1_48 = arith.constant 1 : index
    %123 = memref.load %arg2[%c6_47, %c1_48] : memref<9x4xf32, #tpu.memory_space<smem>>
    %124 = vector.broadcast %123 : f32 to vector<16x16xf32>
    %125 = arith.mulf %120, %124 : vector<16x16xf32>
    %126 = arith.addf %118, %125 : vector<16x16xf32>
    %c7_49 = arith.constant 7 : index
    %c1_50 = arith.constant 1 : index
    %127 = memref.load %arg2[%c7_49, %c1_50] : memref<9x4xf32, #tpu.memory_space<smem>>
    %128 = vector.broadcast %127 : f32 to vector<16x16xf32>
    %129 = arith.mulf %87, %128 : vector<16x16xf32>
    %130 = arith.addf %126, %129 : vector<16x16xf32>
    %c8_51 = arith.constant 8 : index
    %c1_52 = arith.constant 1 : index
    %131 = memref.load %arg2[%c8_51, %c1_52] : memref<9x4xf32, #tpu.memory_space<smem>>
    %132 = vector.broadcast %131 : f32 to vector<16x16xf32>
    %133 = arith.mulf %122, %132 : vector<16x16xf32>
    %134 = arith.addf %130, %133 : vector<16x16xf32>
    %c1_53 = arith.constant 1 : index
    %135 = memref.load %arg3[%c1_53] : memref<4xf32, #tpu.memory_space<smem>>
    %136 = vector.broadcast %135 : f32 to vector<16x16xf32>
    %137 = arith.addf %134, %136 : vector<16x16xf32>
    %c0_54 = arith.constant 0 : index
    %c1_55 = arith.constant 1 : index
    %138 = memref.load %arg4[%c0_54, %c1_55] : memref<8x4xf32, #tpu.memory_space<smem>>
    %139 = vector.broadcast %138 : f32 to vector<16x16xf32>
    %140 = arith.mulf %137, %139 : vector<16x16xf32>
    %141 = arith.addf %60, %140 : vector<16x16xf32>
    %c1_56 = arith.constant 1 : index
    %c1_57 = arith.constant 1 : index
    %142 = memref.load %arg4[%c1_56, %c1_57] : memref<8x4xf32, #tpu.memory_space<smem>>
    %143 = vector.broadcast %142 : f32 to vector<16x16xf32>
    %144 = arith.mulf %137, %143 : vector<16x16xf32>
    %145 = arith.addf %63, %144 : vector<16x16xf32>
    %c2_58 = arith.constant 2 : index
    %c1_59 = arith.constant 1 : index
    %146 = memref.load %arg4[%c2_58, %c1_59] : memref<8x4xf32, #tpu.memory_space<smem>>
    %147 = vector.broadcast %146 : f32 to vector<16x16xf32>
    %148 = arith.mulf %137, %147 : vector<16x16xf32>
    %149 = arith.addf %66, %148 : vector<16x16xf32>
    %c3_60 = arith.constant 3 : index
    %c1_61 = arith.constant 1 : index
    %150 = memref.load %arg4[%c3_60, %c1_61] : memref<8x4xf32, #tpu.memory_space<smem>>
    %151 = vector.broadcast %150 : f32 to vector<16x16xf32>
    %152 = arith.mulf %137, %151 : vector<16x16xf32>
    %153 = arith.addf %69, %152 : vector<16x16xf32>
    %c4_62 = arith.constant 4 : index
    %c1_63 = arith.constant 1 : index
    %154 = memref.load %arg4[%c4_62, %c1_63] : memref<8x4xf32, #tpu.memory_space<smem>>
    %155 = vector.broadcast %154 : f32 to vector<16x16xf32>
    %156 = arith.mulf %137, %155 : vector<16x16xf32>
    %157 = arith.addf %72, %156 : vector<16x16xf32>
    %c5_64 = arith.constant 5 : index
    %c1_65 = arith.constant 1 : index
    %158 = memref.load %arg4[%c5_64, %c1_65] : memref<8x4xf32, #tpu.memory_space<smem>>
    %159 = vector.broadcast %158 : f32 to vector<16x16xf32>
    %160 = arith.mulf %137, %159 : vector<16x16xf32>
    %161 = arith.addf %75, %160 : vector<16x16xf32>
    %c6_66 = arith.constant 6 : index
    %c1_67 = arith.constant 1 : index
    %162 = memref.load %arg4[%c6_66, %c1_67] : memref<8x4xf32, #tpu.memory_space<smem>>
    %163 = vector.broadcast %162 : f32 to vector<16x16xf32>
    %164 = arith.mulf %137, %163 : vector<16x16xf32>
    %165 = arith.addf %78, %164 : vector<16x16xf32>
    %c7_68 = arith.constant 7 : index
    %c1_69 = arith.constant 1 : index
    %166 = memref.load %arg4[%c7_68, %c1_69] : memref<8x4xf32, #tpu.memory_space<smem>>
    %167 = vector.broadcast %166 : f32 to vector<16x16xf32>
    %168 = arith.mulf %137, %167 : vector<16x16xf32>
    %169 = arith.addf %81, %168 : vector<16x16xf32>
    %c0_70 = arith.constant 0 : index
    %c2_71 = arith.constant 2 : index
    %c0_72 = arith.constant 0 : index
    %c0_73 = arith.constant 0 : index
    %170 = vector.load %arg1[%c0_70, %c2_71, %c0_72, %c0_73] : memref<1x4x16x16xf32, #tpu.memory_space<vmem>>, vector<1x1x16x16xf32>
    %171 = vector.shape_cast %170 : vector<1x1x16x16xf32> to vector<16x16xf32>
    %172 = vector.extract_strided_slice %171 {offsets = [0, 0], sizes = [15, 16], strides = [1, 1]} : vector<16x16xf32> to vector<15x16xf32>
    %173 = tpu.concatenate %0, %172 in 0 : vector<1x16xf32>, vector<15x16xf32> -> vector<16x16xf32>
    %174 = vector.extract_strided_slice %171 {offsets = [1, 0], sizes = [15, 16], strides = [1, 1]} : vector<16x16xf32> to vector<15x16xf32>
    %175 = tpu.concatenate %174, %0 in 0 : vector<15x16xf32>, vector<1x16xf32> -> vector<16x16xf32>
    %176 = vector.extract_strided_slice %173 {offsets = [0, 0], sizes = [16, 15], strides = [1, 1]} : vector<16x16xf32> to vector<16x15xf32>
    %177 = tpu.concatenate %1, %176 in 1 : vector<16x1xf32>, vector<16x15xf32> -> vector<16x16xf32>
    %178 = vector.extract_strided_slice %173 {offsets = [0, 1], sizes = [16, 15], strides = [1, 1]} : vector<16x16xf32> to vector<16x15xf32>
    %179 = tpu.concatenate %178, %1 in 1 : vector<16x15xf32>, vector<16x1xf32> -> vector<16x16xf32>
    %c0_74 = arith.constant 0 : index
    %c2_75 = arith.constant 2 : index
    %180 = memref.load %arg2[%c0_74, %c2_75] : memref<9x4xf32, #tpu.memory_space<smem>>
    %181 = vector.broadcast %180 : f32 to vector<16x16xf32>
    %182 = arith.mulf %177, %181 : vector<16x16xf32>
    %c1_76 = arith.constant 1 : index
    %c2_77 = arith.constant 2 : index
    %183 = memref.load %arg2[%c1_76, %c2_77] : memref<9x4xf32, #tpu.memory_space<smem>>
    %184 = vector.broadcast %183 : f32 to vector<16x16xf32>
    %185 = arith.mulf %173, %184 : vector<16x16xf32>
    %186 = arith.addf %182, %185 : vector<16x16xf32>
    %c2_78 = arith.constant 2 : index
    %c2_79 = arith.constant 2 : index
    %187 = memref.load %arg2[%c2_78, %c2_79] : memref<9x4xf32, #tpu.memory_space<smem>>
    %188 = vector.broadcast %187 : f32 to vector<16x16xf32>
    %189 = arith.mulf %179, %188 : vector<16x16xf32>
    %190 = arith.addf %186, %189 : vector<16x16xf32>
    %191 = vector.extract_strided_slice %171 {offsets = [0, 0], sizes = [16, 15], strides = [1, 1]} : vector<16x16xf32> to vector<16x15xf32>
    %192 = tpu.concatenate %1, %191 in 1 : vector<16x1xf32>, vector<16x15xf32> -> vector<16x16xf32>
    %193 = vector.extract_strided_slice %171 {offsets = [0, 1], sizes = [16, 15], strides = [1, 1]} : vector<16x16xf32> to vector<16x15xf32>
    %194 = tpu.concatenate %193, %1 in 1 : vector<16x15xf32>, vector<16x1xf32> -> vector<16x16xf32>
    %c3_80 = arith.constant 3 : index
    %c2_81 = arith.constant 2 : index
    %195 = memref.load %arg2[%c3_80, %c2_81] : memref<9x4xf32, #tpu.memory_space<smem>>
    %196 = vector.broadcast %195 : f32 to vector<16x16xf32>
    %197 = arith.mulf %192, %196 : vector<16x16xf32>
    %198 = arith.addf %190, %197 : vector<16x16xf32>
    %c4_82 = arith.constant 4 : index
    %c2_83 = arith.constant 2 : index
    %199 = memref.load %arg2[%c4_82, %c2_83] : memref<9x4xf32, #tpu.memory_space<smem>>
    %200 = vector.broadcast %199 : f32 to vector<16x16xf32>
    %201 = arith.mulf %171, %200 : vector<16x16xf32>
    %202 = arith.addf %198, %201 : vector<16x16xf32>
    %c5_84 = arith.constant 5 : index
    %c2_85 = arith.constant 2 : index
    %203 = memref.load %arg2[%c5_84, %c2_85] : memref<9x4xf32, #tpu.memory_space<smem>>
    %204 = vector.broadcast %203 : f32 to vector<16x16xf32>
    %205 = arith.mulf %194, %204 : vector<16x16xf32>
    %206 = arith.addf %202, %205 : vector<16x16xf32>
    %207 = vector.extract_strided_slice %175 {offsets = [0, 0], sizes = [16, 15], strides = [1, 1]} : vector<16x16xf32> to vector<16x15xf32>
    %208 = tpu.concatenate %1, %207 in 1 : vector<16x1xf32>, vector<16x15xf32> -> vector<16x16xf32>
    %209 = vector.extract_strided_slice %175 {offsets = [0, 1], sizes = [16, 15], strides = [1, 1]} : vector<16x16xf32> to vector<16x15xf32>
    %210 = tpu.concatenate %209, %1 in 1 : vector<16x15xf32>, vector<16x1xf32> -> vector<16x16xf32>
    %c6_86 = arith.constant 6 : index
    %c2_87 = arith.constant 2 : index
    %211 = memref.load %arg2[%c6_86, %c2_87] : memref<9x4xf32, #tpu.memory_space<smem>>
    %212 = vector.broadcast %211 : f32 to vector<16x16xf32>
    %213 = arith.mulf %208, %212 : vector<16x16xf32>
    %214 = arith.addf %206, %213 : vector<16x16xf32>
    %c7_88 = arith.constant 7 : index
    %c2_89 = arith.constant 2 : index
    %215 = memref.load %arg2[%c7_88, %c2_89] : memref<9x4xf32, #tpu.memory_space<smem>>
    %216 = vector.broadcast %215 : f32 to vector<16x16xf32>
    %217 = arith.mulf %175, %216 : vector<16x16xf32>
    %218 = arith.addf %214, %217 : vector<16x16xf32>
    %c8_90 = arith.constant 8 : index
    %c2_91 = arith.constant 2 : index
    %219 = memref.load %arg2[%c8_90, %c2_91] : memref<9x4xf32, #tpu.memory_space<smem>>
    %220 = vector.broadcast %219 : f32 to vector<16x16xf32>
    %221 = arith.mulf %210, %220 : vector<16x16xf32>
    %222 = arith.addf %218, %221 : vector<16x16xf32>
    %c2_92 = arith.constant 2 : index
    %223 = memref.load %arg3[%c2_92] : memref<4xf32, #tpu.memory_space<smem>>
    %224 = vector.broadcast %223 : f32 to vector<16x16xf32>
    %225 = arith.addf %222, %224 : vector<16x16xf32>
    %c0_93 = arith.constant 0 : index
    %c2_94 = arith.constant 2 : index
    %226 = memref.load %arg4[%c0_93, %c2_94] : memref<8x4xf32, #tpu.memory_space<smem>>
    %227 = vector.broadcast %226 : f32 to vector<16x16xf32>
    %228 = arith.mulf %225, %227 : vector<16x16xf32>
    %229 = arith.addf %141, %228 : vector<16x16xf32>
    %c1_95 = arith.constant 1 : index
    %c2_96 = arith.constant 2 : index
    %230 = memref.load %arg4[%c1_95, %c2_96] : memref<8x4xf32, #tpu.memory_space<smem>>
    %231 = vector.broadcast %230 : f32 to vector<16x16xf32>
    %232 = arith.mulf %225, %231 : vector<16x16xf32>
    %233 = arith.addf %145, %232 : vector<16x16xf32>
    %c2_97 = arith.constant 2 : index
    %c2_98 = arith.constant 2 : index
    %234 = memref.load %arg4[%c2_97, %c2_98] : memref<8x4xf32, #tpu.memory_space<smem>>
    %235 = vector.broadcast %234 : f32 to vector<16x16xf32>
    %236 = arith.mulf %225, %235 : vector<16x16xf32>
    %237 = arith.addf %149, %236 : vector<16x16xf32>
    %c3_99 = arith.constant 3 : index
    %c2_100 = arith.constant 2 : index
    %238 = memref.load %arg4[%c3_99, %c2_100] : memref<8x4xf32, #tpu.memory_space<smem>>
    %239 = vector.broadcast %238 : f32 to vector<16x16xf32>
    %240 = arith.mulf %225, %239 : vector<16x16xf32>
    %241 = arith.addf %153, %240 : vector<16x16xf32>
    %c4_101 = arith.constant 4 : index
    %c2_102 = arith.constant 2 : index
    %242 = memref.load %arg4[%c4_101, %c2_102] : memref<8x4xf32, #tpu.memory_space<smem>>
    %243 = vector.broadcast %242 : f32 to vector<16x16xf32>
    %244 = arith.mulf %225, %243 : vector<16x16xf32>
    %245 = arith.addf %157, %244 : vector<16x16xf32>
    %c5_103 = arith.constant 5 : index
    %c2_104 = arith.constant 2 : index
    %246 = memref.load %arg4[%c5_103, %c2_104] : memref<8x4xf32, #tpu.memory_space<smem>>
    %247 = vector.broadcast %246 : f32 to vector<16x16xf32>
    %248 = arith.mulf %225, %247 : vector<16x16xf32>
    %249 = arith.addf %161, %248 : vector<16x16xf32>
    %c6_105 = arith.constant 6 : index
    %c2_106 = arith.constant 2 : index
    %250 = memref.load %arg4[%c6_105, %c2_106] : memref<8x4xf32, #tpu.memory_space<smem>>
    %251 = vector.broadcast %250 : f32 to vector<16x16xf32>
    %252 = arith.mulf %225, %251 : vector<16x16xf32>
    %253 = arith.addf %165, %252 : vector<16x16xf32>
    %c7_107 = arith.constant 7 : index
    %c2_108 = arith.constant 2 : index
    %254 = memref.load %arg4[%c7_107, %c2_108] : memref<8x4xf32, #tpu.memory_space<smem>>
    %255 = vector.broadcast %254 : f32 to vector<16x16xf32>
    %256 = arith.mulf %225, %255 : vector<16x16xf32>
    %257 = arith.addf %169, %256 : vector<16x16xf32>
    %c0_109 = arith.constant 0 : index
    %c3_110 = arith.constant 3 : index
    %c0_111 = arith.constant 0 : index
    %c0_112 = arith.constant 0 : index
    %258 = vector.load %arg1[%c0_109, %c3_110, %c0_111, %c0_112] : memref<1x4x16x16xf32, #tpu.memory_space<vmem>>, vector<1x1x16x16xf32>
    %259 = vector.shape_cast %258 : vector<1x1x16x16xf32> to vector<16x16xf32>
    %260 = vector.extract_strided_slice %259 {offsets = [0, 0], sizes = [15, 16], strides = [1, 1]} : vector<16x16xf32> to vector<15x16xf32>
    %261 = tpu.concatenate %0, %260 in 0 : vector<1x16xf32>, vector<15x16xf32> -> vector<16x16xf32>
    %262 = vector.extract_strided_slice %259 {offsets = [1, 0], sizes = [15, 16], strides = [1, 1]} : vector<16x16xf32> to vector<15x16xf32>
    %263 = tpu.concatenate %262, %0 in 0 : vector<15x16xf32>, vector<1x16xf32> -> vector<16x16xf32>
    %264 = vector.extract_strided_slice %261 {offsets = [0, 0], sizes = [16, 15], strides = [1, 1]} : vector<16x16xf32> to vector<16x15xf32>
    %265 = tpu.concatenate %1, %264 in 1 : vector<16x1xf32>, vector<16x15xf32> -> vector<16x16xf32>
    %266 = vector.extract_strided_slice %261 {offsets = [0, 1], sizes = [16, 15], strides = [1, 1]} : vector<16x16xf32> to vector<16x15xf32>
    %267 = tpu.concatenate %266, %1 in 1 : vector<16x15xf32>, vector<16x1xf32> -> vector<16x16xf32>
    %c0_113 = arith.constant 0 : index
    %c3_114 = arith.constant 3 : index
    %268 = memref.load %arg2[%c0_113, %c3_114] : memref<9x4xf32, #tpu.memory_space<smem>>
    %269 = vector.broadcast %268 : f32 to vector<16x16xf32>
    %270 = arith.mulf %265, %269 : vector<16x16xf32>
    %c1_115 = arith.constant 1 : index
    %c3_116 = arith.constant 3 : index
    %271 = memref.load %arg2[%c1_115, %c3_116] : memref<9x4xf32, #tpu.memory_space<smem>>
    %272 = vector.broadcast %271 : f32 to vector<16x16xf32>
    %273 = arith.mulf %261, %272 : vector<16x16xf32>
    %274 = arith.addf %270, %273 : vector<16x16xf32>
    %c2_117 = arith.constant 2 : index
    %c3_118 = arith.constant 3 : index
    %275 = memref.load %arg2[%c2_117, %c3_118] : memref<9x4xf32, #tpu.memory_space<smem>>
    %276 = vector.broadcast %275 : f32 to vector<16x16xf32>
    %277 = arith.mulf %267, %276 : vector<16x16xf32>
    %278 = arith.addf %274, %277 : vector<16x16xf32>
    %279 = vector.extract_strided_slice %259 {offsets = [0, 0], sizes = [16, 15], strides = [1, 1]} : vector<16x16xf32> to vector<16x15xf32>
    %280 = tpu.concatenate %1, %279 in 1 : vector<16x1xf32>, vector<16x15xf32> -> vector<16x16xf32>
    %281 = vector.extract_strided_slice %259 {offsets = [0, 1], sizes = [16, 15], strides = [1, 1]} : vector<16x16xf32> to vector<16x15xf32>
    %282 = tpu.concatenate %281, %1 in 1 : vector<16x15xf32>, vector<16x1xf32> -> vector<16x16xf32>
    %c3_119 = arith.constant 3 : index
    %c3_120 = arith.constant 3 : index
    %283 = memref.load %arg2[%c3_119, %c3_120] : memref<9x4xf32, #tpu.memory_space<smem>>
    %284 = vector.broadcast %283 : f32 to vector<16x16xf32>
    %285 = arith.mulf %280, %284 : vector<16x16xf32>
    %286 = arith.addf %278, %285 : vector<16x16xf32>
    %c4_121 = arith.constant 4 : index
    %c3_122 = arith.constant 3 : index
    %287 = memref.load %arg2[%c4_121, %c3_122] : memref<9x4xf32, #tpu.memory_space<smem>>
    %288 = vector.broadcast %287 : f32 to vector<16x16xf32>
    %289 = arith.mulf %259, %288 : vector<16x16xf32>
    %290 = arith.addf %286, %289 : vector<16x16xf32>
    %c5_123 = arith.constant 5 : index
    %c3_124 = arith.constant 3 : index
    %291 = memref.load %arg2[%c5_123, %c3_124] : memref<9x4xf32, #tpu.memory_space<smem>>
    %292 = vector.broadcast %291 : f32 to vector<16x16xf32>
    %293 = arith.mulf %282, %292 : vector<16x16xf32>
    %294 = arith.addf %290, %293 : vector<16x16xf32>
    %295 = vector.extract_strided_slice %263 {offsets = [0, 0], sizes = [16, 15], strides = [1, 1]} : vector<16x16xf32> to vector<16x15xf32>
    %296 = tpu.concatenate %1, %295 in 1 : vector<16x1xf32>, vector<16x15xf32> -> vector<16x16xf32>
    %297 = vector.extract_strided_slice %263 {offsets = [0, 1], sizes = [16, 15], strides = [1, 1]} : vector<16x16xf32> to vector<16x15xf32>
    %298 = tpu.concatenate %297, %1 in 1 : vector<16x15xf32>, vector<16x1xf32> -> vector<16x16xf32>
    %c6_125 = arith.constant 6 : index
    %c3_126 = arith.constant 3 : index
    %299 = memref.load %arg2[%c6_125, %c3_126] : memref<9x4xf32, #tpu.memory_space<smem>>
    %300 = vector.broadcast %299 : f32 to vector<16x16xf32>
    %301 = arith.mulf %296, %300 : vector<16x16xf32>
    %302 = arith.addf %294, %301 : vector<16x16xf32>
    %c7_127 = arith.constant 7 : index
    %c3_128 = arith.constant 3 : index
    %303 = memref.load %arg2[%c7_127, %c3_128] : memref<9x4xf32, #tpu.memory_space<smem>>
    %304 = vector.broadcast %303 : f32 to vector<16x16xf32>
    %305 = arith.mulf %263, %304 : vector<16x16xf32>
    %306 = arith.addf %302, %305 : vector<16x16xf32>
    %c8_129 = arith.constant 8 : index
    %c3_130 = arith.constant 3 : index
    %307 = memref.load %arg2[%c8_129, %c3_130] : memref<9x4xf32, #tpu.memory_space<smem>>
    %308 = vector.broadcast %307 : f32 to vector<16x16xf32>
    %309 = arith.mulf %298, %308 : vector<16x16xf32>
    %310 = arith.addf %306, %309 : vector<16x16xf32>
    %c3_131 = arith.constant 3 : index
    %311 = memref.load %arg3[%c3_131] : memref<4xf32, #tpu.memory_space<smem>>
    %312 = vector.broadcast %311 : f32 to vector<16x16xf32>
    %313 = arith.addf %310, %312 : vector<16x16xf32>
    %c0_132 = arith.constant 0 : index
    %c3_133 = arith.constant 3 : index
    %314 = memref.load %arg4[%c0_132, %c3_133] : memref<8x4xf32, #tpu.memory_space<smem>>
    %315 = vector.broadcast %314 : f32 to vector<16x16xf32>
    %316 = arith.mulf %313, %315 : vector<16x16xf32>
    %317 = arith.addf %229, %316 : vector<16x16xf32>
    %c1_134 = arith.constant 1 : index
    %c3_135 = arith.constant 3 : index
    %318 = memref.load %arg4[%c1_134, %c3_135] : memref<8x4xf32, #tpu.memory_space<smem>>
    %319 = vector.broadcast %318 : f32 to vector<16x16xf32>
    %320 = arith.mulf %313, %319 : vector<16x16xf32>
    %321 = arith.addf %233, %320 : vector<16x16xf32>
    %c2_136 = arith.constant 2 : index
    %c3_137 = arith.constant 3 : index
    %322 = memref.load %arg4[%c2_136, %c3_137] : memref<8x4xf32, #tpu.memory_space<smem>>
    %323 = vector.broadcast %322 : f32 to vector<16x16xf32>
    %324 = arith.mulf %313, %323 : vector<16x16xf32>
    %325 = arith.addf %237, %324 : vector<16x16xf32>
    %c3_138 = arith.constant 3 : index
    %c3_139 = arith.constant 3 : index
    %326 = memref.load %arg4[%c3_138, %c3_139] : memref<8x4xf32, #tpu.memory_space<smem>>
    %327 = vector.broadcast %326 : f32 to vector<16x16xf32>
    %328 = arith.mulf %313, %327 : vector<16x16xf32>
    %329 = arith.addf %241, %328 : vector<16x16xf32>
    %c4_140 = arith.constant 4 : index
    %c3_141 = arith.constant 3 : index
    %330 = memref.load %arg4[%c4_140, %c3_141] : memref<8x4xf32, #tpu.memory_space<smem>>
    %331 = vector.broadcast %330 : f32 to vector<16x16xf32>
    %332 = arith.mulf %313, %331 : vector<16x16xf32>
    %333 = arith.addf %245, %332 : vector<16x16xf32>
    %c5_142 = arith.constant 5 : index
    %c3_143 = arith.constant 3 : index
    %334 = memref.load %arg4[%c5_142, %c3_143] : memref<8x4xf32, #tpu.memory_space<smem>>
    %335 = vector.broadcast %334 : f32 to vector<16x16xf32>
    %336 = arith.mulf %313, %335 : vector<16x16xf32>
    %337 = arith.addf %249, %336 : vector<16x16xf32>
    %c6_144 = arith.constant 6 : index
    %c3_145 = arith.constant 3 : index
    %338 = memref.load %arg4[%c6_144, %c3_145] : memref<8x4xf32, #tpu.memory_space<smem>>
    %339 = vector.broadcast %338 : f32 to vector<16x16xf32>
    %340 = arith.mulf %313, %339 : vector<16x16xf32>
    %341 = arith.addf %253, %340 : vector<16x16xf32>
    %c7_146 = arith.constant 7 : index
    %c3_147 = arith.constant 3 : index
    %342 = memref.load %arg4[%c7_146, %c3_147] : memref<8x4xf32, #tpu.memory_space<smem>>
    %343 = vector.broadcast %342 : f32 to vector<16x16xf32>
    %344 = arith.mulf %313, %343 : vector<16x16xf32>
    %345 = arith.addf %257, %344 : vector<16x16xf32>
    %c0_148 = arith.constant 0 : index
    %346 = memref.load %arg5[%c0_148] : memref<8xf32, #tpu.memory_space<smem>>
    %347 = vector.broadcast %346 : f32 to vector<16x16xf32>
    %348 = arith.addf %317, %347 : vector<16x16xf32>
    %c0_149 = arith.constant 0 : index
    %c0_150 = arith.constant 0 : index
    %c0_151 = arith.constant 0 : index
    %c0_152 = arith.constant 0 : index
    %349 = vector.load %arg6[%c0_149, %c0_150, %c0_151, %c0_152] : memref<1x8x16x16xf32, #tpu.memory_space<vmem>>, vector<1x1x16x16xf32>
    %350 = vector.shape_cast %349 : vector<1x1x16x16xf32> to vector<16x16xf32>
    %351 = vector.shape_cast %348 : vector<16x16xf32> to vector<1x1x16x16xf32>
    tpu.vector_store %arg6[%c0_149, %c0_150, %c0_151, %c0_152], %351 {strides = array<i32>} : memref<1x8x16x16xf32, #tpu.memory_space<vmem>>, vector<1x1x16x16xf32>,
    %c1_153 = arith.constant 1 : index
    %352 = memref.load %arg5[%c1_153] : memref<8xf32, #tpu.memory_space<smem>>
    %353 = vector.broadcast %352 : f32 to vector<16x16xf32>
    %354 = arith.addf %321, %353 : vector<16x16xf32>
    %c0_154 = arith.constant 0 : index
    %c1_155 = arith.constant 1 : index
    %c0_156 = arith.constant 0 : index
    %c0_157 = arith.constant 0 : index
    %355 = vector.load %arg6[%c0_154, %c1_155, %c0_156, %c0_157] : memref<1x8x16x16xf32, #tpu.memory_space<vmem>>, vector<1x1x16x16xf32>
    %356 = vector.shape_cast %355 : vector<1x1x16x16xf32> to vector<16x16xf32>
    %357 = vector.shape_cast %354 : vector<16x16xf32> to vector<1x1x16x16xf32>
    tpu.vector_store %arg6[%c0_154, %c1_155, %c0_156, %c0_157], %357 {strides = array<i32>} : memref<1x8x16x16xf32, #tpu.memory_space<vmem>>, vector<1x1x16x16xf32>,
    %c2_158 = arith.constant 2 : index
    %358 = memref.load %arg5[%c2_158] : memref<8xf32, #tpu.memory_space<smem>>
    %359 = vector.broadcast %358 : f32 to vector<16x16xf32>
    %360 = arith.addf %325, %359 : vector<16x16xf32>
    %c0_159 = arith.constant 0 : index
    %c2_160 = arith.constant 2 : index
    %c0_161 = arith.constant 0 : index
    %c0_162 = arith.constant 0 : index
    %361 = vector.load %arg6[%c0_159, %c2_160, %c0_161, %c0_162] : memref<1x8x16x16xf32, #tpu.memory_space<vmem>>, vector<1x1x16x16xf32>
    %362 = vector.shape_cast %361 : vector<1x1x16x16xf32> to vector<16x16xf32>
    %363 = vector.shape_cast %360 : vector<16x16xf32> to vector<1x1x16x16xf32>
    tpu.vector_store %arg6[%c0_159, %c2_160, %c0_161, %c0_162], %363 {strides = array<i32>} : memref<1x8x16x16xf32, #tpu.memory_space<vmem>>, vector<1x1x16x16xf32>,
    %c3_163 = arith.constant 3 : index
    %364 = memref.load %arg5[%c3_163] : memref<8xf32, #tpu.memory_space<smem>>
    %365 = vector.broadcast %364 : f32 to vector<16x16xf32>
    %366 = arith.addf %329, %365 : vector<16x16xf32>
    %c0_164 = arith.constant 0 : index
    %c3_165 = arith.constant 3 : index
    %c0_166 = arith.constant 0 : index
    %c0_167 = arith.constant 0 : index
    %367 = vector.load %arg6[%c0_164, %c3_165, %c0_166, %c0_167] : memref<1x8x16x16xf32, #tpu.memory_space<vmem>>, vector<1x1x16x16xf32>
    %368 = vector.shape_cast %367 : vector<1x1x16x16xf32> to vector<16x16xf32>
    %369 = vector.shape_cast %366 : vector<16x16xf32> to vector<1x1x16x16xf32>
    tpu.vector_store %arg6[%c0_164, %c3_165, %c0_166, %c0_167], %369 {strides = array<i32>} : memref<1x8x16x16xf32, #tpu.memory_space<vmem>>, vector<1x1x16x16xf32>,
    %c4_168 = arith.constant 4 : index
    %370 = memref.load %arg5[%c4_168] : memref<8xf32, #tpu.memory_space<smem>>
    %371 = vector.broadcast %370 : f32 to vector<16x16xf32>
    %372 = arith.addf %333, %371 : vector<16x16xf32>
    %c0_169 = arith.constant 0 : index
    %c4_170 = arith.constant 4 : index
    %c0_171 = arith.constant 0 : index
    %c0_172 = arith.constant 0 : index
    %373 = vector.load %arg6[%c0_169, %c4_170, %c0_171, %c0_172] : memref<1x8x16x16xf32, #tpu.memory_space<vmem>>, vector<1x1x16x16xf32>
    %374 = vector.shape_cast %373 : vector<1x1x16x16xf32> to vector<16x16xf32>
    %375 = vector.shape_cast %372 : vector<16x16xf32> to vector<1x1x16x16xf32>
    tpu.vector_store %arg6[%c0_169, %c4_170, %c0_171, %c0_172], %375 {strides = array<i32>} : memref<1x8x16x16xf32, #tpu.memory_space<vmem>>, vector<1x1x16x16xf32>,
    %c5_173 = arith.constant 5 : index
    %376 = memref.load %arg5[%c5_173] : memref<8xf32, #tpu.memory_space<smem>>
    %377 = vector.broadcast %376 : f32 to vector<16x16xf32>
    %378 = arith.addf %337, %377 : vector<16x16xf32>
    %c0_174 = arith.constant 0 : index
    %c5_175 = arith.constant 5 : index
    %c0_176 = arith.constant 0 : index
    %c0_177 = arith.constant 0 : index
    %379 = vector.load %arg6[%c0_174, %c5_175, %c0_176, %c0_177] : memref<1x8x16x16xf32, #tpu.memory_space<vmem>>, vector<1x1x16x16xf32>
    %380 = vector.shape_cast %379 : vector<1x1x16x16xf32> to vector<16x16xf32>
    %381 = vector.shape_cast %378 : vector<16x16xf32> to vector<1x1x16x16xf32>
    tpu.vector_store %arg6[%c0_174, %c5_175, %c0_176, %c0_177], %381 {strides = array<i32>} : memref<1x8x16x16xf32, #tpu.memory_space<vmem>>, vector<1x1x16x16xf32>,
    %c6_178 = arith.constant 6 : index
    %382 = memref.load %arg5[%c6_178] : memref<8xf32, #tpu.memory_space<smem>>
    %383 = vector.broadcast %382 : f32 to vector<16x16xf32>
    %384 = arith.addf %341, %383 : vector<16x16xf32>
    %c0_179 = arith.constant 0 : index
    %c6_180 = arith.constant 6 : index
    %c0_181 = arith.constant 0 : index
    %c0_182 = arith.constant 0 : index
    %385 = vector.load %arg6[%c0_179, %c6_180, %c0_181, %c0_182] : memref<1x8x16x16xf32, #tpu.memory_space<vmem>>, vector<1x1x16x16xf32>
    %386 = vector.shape_cast %385 : vector<1x1x16x16xf32> to vector<16x16xf32>
    %387 = vector.shape_cast %384 : vector<16x16xf32> to vector<1x1x16x16xf32>
    tpu.vector_store %arg6[%c0_179, %c6_180, %c0_181, %c0_182], %387 {strides = array<i32>} : memref<1x8x16x16xf32, #tpu.memory_space<vmem>>, vector<1x1x16x16xf32>,
    %c7_183 = arith.constant 7 : index
    %388 = memref.load %arg5[%c7_183] : memref<8xf32, #tpu.memory_space<smem>>
    %389 = vector.broadcast %388 : f32 to vector<16x16xf32>
    %390 = arith.addf %345, %389 : vector<16x16xf32>
    %c0_184 = arith.constant 0 : index
    %c7_185 = arith.constant 7 : index
    %c0_186 = arith.constant 0 : index
    %c0_187 = arith.constant 0 : index
    %391 = vector.load %arg6[%c0_184, %c7_185, %c0_186, %c0_187] : memref<1x8x16x16xf32, #tpu.memory_space<vmem>>, vector<1x1x16x16xf32>
    %392 = vector.shape_cast %391 : vector<1x1x16x16xf32> to vector<16x16xf32>
    %393 = vector.shape_cast %390 : vector<16x16xf32> to vector<1x1x16x16xf32>
    tpu.vector_store %arg6[%c0_184, %c7_185, %c0_186, %c0_187], %393 {strides = array<i32>} : memref<1x8x16x16xf32, #tpu.memory_space<vmem>>, vector<1x1x16x16xf32>,
    return
  }
  func.func @transform_0(%arg0: i32) -> (i32, i32, i32, i32) {
    %c0_i32 = arith.constant 0 : i32
    %c0_i32_0 = arith.constant 0 : i32
    %c0_i32_1 = arith.constant 0 : i32
    %c0_i32_2 = arith.constant 0 : i32
    return %arg0, %c0_i32, %c0_i32_0, %c0_i32_1 : i32, i32, i32, i32
  }
  func.func @transform_1(%arg0: i32) -> (i32, i32) {
    %c0_i32 = arith.constant 0 : i32
    %c0_i32_0 = arith.constant 0 : i32
    %c0_i32_1 = arith.constant 0 : i32
    return %c0_i32, %c0_i32_0 : i32, i32
  }
  func.func @transform_2(%arg0: i32) -> i32 {
    %c0_i32 = arith.constant 0 : i32
    %c0_i32_0 = arith.constant 0 : i32
    return %c0_i32 : i32
  }
  func.func @transform_3(%arg0: i32) -> (i32, i32) {
    %c0_i32 = arith.constant 0 : i32
    %c0_i32_0 = arith.constant 0 : i32
    %c0_i32_1 = arith.constant 0 : i32
    return %c0_i32, %c0_i32_0 : i32, i32
  }
  func.func @transform_4(%arg0: i32) -> i32 {
    %c0_i32 = arith.constant 0 : i32
    %c0_i32_0 = arith.constant 0 : i32
    return %c0_i32 : i32
  }
  func.func @transform_5(%arg0: i32) -> (i32, i32, i32, i32) {
    %c0_i32 = arith.constant 0 : i32
    %c0_i32_0 = arith.constant 0 : i32
    %c0_i32_1 = arith.constant 0 : i32
    %c0_i32_2 = arith.constant 0 : i32
    return %arg0, %c0_i32, %c0_i32_0, %c0_i32_1 : i32, i32, i32, i32
  }
}

</mosaic_0001>

<llo_original>
// kernel: tpu_custom_call.1
$region0: #{tpu_custom_call.1}
  #allocation0 [shape = 'u32[]', space=smem, size = 0x4, offset = 0x4, fixed_abs, tag = 'smem constant byte address 0x4 - core index']
  #allocation1 [shape = 'u32[72,128]{1,0:T(1,128)}', space=vmem, size = 0x9000, scoped, tag = 'internal scratch']
  %s0 = inlined_call_operand.hbm [shape: f32[2,4,16,16], index: 0, kind: input, shape index: {}]
  %s1 = inlined_call_operand.vmem [shape: f32[9,4], index: 1, kind: input, shape index: {}]
  %s2 = inlined_call_operand.vmem [shape: f32[4], index: 2, kind: input, shape index: {}]
  %s3 = inlined_call_operand.vmem [shape: f32[8,4], index: 3, kind: input, shape index: {}]
  %s4 = inlined_call_operand.vmem [shape: f32[8], index: 4, kind: input, shape index: {}]
  %s5 = inlined_call_operand.hbm [shape: f32[2,8,16,16], index: 5, kind: output, shape index: {}]
  %s6 = sld [smem:[#allocation0]]
  $region73: #{tpu_custom_call.1} parent=0
    _
  %s8 = ssub.s32 1, %s6
  %s9 = scalar_select 0, %s8, %s6
  $region1: #{tpu_custom_call.1} parent=0
    #allocation2 [shape = 'u8[65536]{0}', space=vmem, size = 0x10000, scoped, tag = 'input window, operand 0']
    #allocation3 [shape = 's32[2]{0}', space=sflag, size = 0x8, scoped, tag = 'scoped memory for tpu_custom_call.1']
    #allocation4 [shape = 's32[2]{0}', space=sflag, size = 0x8, scoped, tag = 'scoped memory for tpu_custom_call.1']
    #allocation5 [shape = 's32[2]{0}', space=sflag, size = 0x8, scoped, tag = 'scoped memory for tpu_custom_call.1']
    #allocation6 [shape = 'u8[8192]{0}', space=smem, size = 0x2000, scoped, tag = 'input window, operand 1, single buffered']
    #allocation7 [shape = 'u8[512]{0}', space=smem, size = 0x200, scoped, tag = 'input window, operand 2, single buffered']
    #allocation8 [shape = 's32[1]{0}', space=sflag, size = 0x4, scoped, tag = 'scoped memory for tpu_custom_call.1']
    #allocation9 [shape = 'u8[4096]{0}', space=smem, size = 0x1000, scoped, tag = 'input window, operand 3, single buffered']
    #allocation10 [shape = 'u8[512]{0}', space=smem, size = 0x200, scoped, tag = 'input window, operand 4, single buffered']
    #allocation11 [shape = 's32[1]{0}', space=sflag, size = 0x4, scoped, tag = 'scoped memory for tpu_custom_call.1']
    #allocation12 [shape = 'u8[131072]{0}', space=vmem, size = 0x20000, scoped, tag = 'output window, operand 0']
    %10 = vsyncpa [#allocation3], 0
    %s11 = scalar_lea.sflag [#allocation3], 1
    %12 = vsyncpa %s11, 0
    %13 = vsyncpa [#allocation5], 0
    %14 = vsyncpa [#allocation8], 0
    %15 = vsyncpa [#allocation11], 0
    %16 = vsyncpa [#allocation4], 0
    %s17 = scalar_lea.sflag [#allocation4], 1
    %18 = vsyncpa %s17, 0
    loop: start=0, step=1, limit=4
    $region2: #{tpu_custom_call.1} parent=1 // loop_pre_header
      _
    $region3: #{tpu_custom_call.1} parent=1 // loop_header
      %s20 = sphi 0, %s24
      %p21 = scmp.ge.s32.totalorder %s20, 4
      %s30 = sphi 0, %s32
      %s33 = sphi 0, %s30
      %s34 = sphi 0, %s33
      %s50 = sphi 0, %s34
      %s54 = sphi 0, %s54
      %s56 = sphi 0, %s54
      %s57 = sphi 0, %s56
      %s71 = sphi 0, %s57
      %s75 = sphi 0, %s75
      %s77 = sphi 0, %s75
      %s78 = sphi 0, %s77
      %s92 = sphi 0, %s78
      %s96 = sphi 0, %s96
      %s98 = sphi 0, %s96
      %s99 = sphi 0, %s98
      %s113 = sphi 0, %s99
      %s117 = sphi 0, %s117
      %s119 = sphi 0, %s117
      %s120 = sphi 0, %s119
      %s134 = sphi 0, %s120
      %s140 = sphi 0, %s142
      %s143 = sphi 0, %s140
      %s144 = sphi 0, %s143
      %s160 = sphi 0, %s144
    $region4: #{tpu_custom_call.1} parent=1 // loop_header_branch
      %23 = sbr.rel (%p21) target = $region8
    $region5: #{tpu_custom_call.1} parent=1 // loop_body
      %s25 = ssub.s32 %s20, 1
      %s26 = ssub.s32 %s20, 2
      %s27 = sadd.s32 %s20, 1
      %s28 = ssub.s32 %s20, %s27
      %p29 = scmp.eq.s32.totalorder %s28, 0
      %s31 = sadd.s32 %s30, 1
      %s32 = scalar_select %p29, %s30, %s31
      %p35 = pneg %p29
      %p36 = scmp.eq.s32.totalorder %s20, 1
      %p37 = por %p35, %p36
      %p38 = scmp.ne.s32.totalorder %s30, %s33
      %p39 = scmp.eq.s32.totalorder %s20, 0
      %p40 = por %p38, %p39
      %p41 = scmp.ne.s32.totalorder %s30, %s33
      %p42 = scmp.eq.s32.totalorder %s25, 1
      %p43 = por %p41, %p42
      %p44 = scmp.ne.s32.totalorder %s33, %s34
      %p45 = scmp.eq.s32.totalorder %s25, 0
      %p46 = por %p44, %p45
      %p47 = scmp.ne.s32.totalorder %s33, %s34
      %p48 = scmp.eq.s32.totalorder %s26, 1
      %p49 = por %p47, %p48
      %p51 = scmp.ne.s32.totalorder %s34, %s50
      %p52 = scmp.eq.s32.totalorder %s26, 0
      %p53 = por %p51, %p52
      %s55 = sadd.s32 %s54, 1
      %p58 = scmp.eq.s32.totalorder %s20, 1
      %p59 = scmp.ne.s32.totalorder %s54, %s56
      %p60 = scmp.eq.s32.totalorder %s20, 0
      %p61 = por %p59, %p60
      %p62 = scmp.ne.s32.totalorder %s54, %s56
      %p63 = scmp.eq.s32.totalorder %s25, 1
      %p64 = por %p62, %p63
      %p65 = scmp.ne.s32.totalorder %s56, %s57
      %p66 = scmp.eq.s32.totalorder %s25, 0
      %p67 = por %p65, %p66
      %p68 = scmp.ne.s32.totalorder %s56, %s57
      %p69 = scmp.eq.s32.totalorder %s26, 1
      %p70 = por %p68, %p69
      %p72 = scmp.ne.s32.totalorder %s57, %s71
      %p73 = scmp.eq.s32.totalorder %s26, 0
      %p74 = por %p72, %p73
      %s76 = sadd.s32 %s75, 1
      %p79 = scmp.eq.s32.totalorder %s20, 1
      %p80 = scmp.ne.s32.totalorder %s75, %s77
      %p81 = scmp.eq.s32.totalorder %s20, 0
      %p82 = por %p80, %p81
      %p83 = scmp.ne.s32.totalorder %s75, %s77
      %p84 = scmp.eq.s32.totalorder %s25, 1
      %p85 = por %p83, %p84
      %p86 = scmp.ne.s32.totalorder %s77, %s78
      %p87 = scmp.eq.s32.totalorder %s25, 0
      %p88 = por %p86, %p87
      %p89 = scmp.ne.s32.totalorder %s77, %s78
      %p90 = scmp.eq.s32.totalorder %s26, 1
      %p91 = por %p89, %p90
      %p93 = scmp.ne.s32.totalorder %s78, %s92
      %p94 = scmp.eq.s32.totalorder %s26, 0
      %p95 = por %p93, %p94
      %s97 = sadd.s32 %s96, 1
      %p100 = scmp.eq.s32.totalorder %s20, 1
      %p101 = scmp.ne.s32.totalorder %s96, %s98
      %p102 = scmp.eq.s32.totalorder %s20, 0
      %p103 = por %p101, %p102
      %p104 = scmp.ne.s32.totalorder %s96, %s98
      %p105 = scmp.eq.s32.totalorder %s25, 1
      %p106 = por %p104, %p105
      %p107 = scmp.ne.s32.totalorder %s98, %s99
      %p108 = scmp.eq.s32.totalorder %s25, 0
      %p109 = por %p107, %p108
      %p110 = scmp.ne.s32.totalorder %s98, %s99
      %p111 = scmp.eq.s32.totalorder %s26, 1
      %p112 = por %p110, %p111
      %p114 = scmp.ne.s32.totalorder %s99, %s113
      %p115 = scmp.eq.s32.totalorder %s26, 0
      %p116 = por %p114, %p115
      %s118 = sadd.s32 %s117, 1
      %p121 = scmp.eq.s32.totalorder %s20, 1
      %p122 = scmp.ne.s32.totalorder %s117, %s119
      %p123 = scmp.eq.s32.totalorder %s20, 0
      %p124 = por %p122, %p123
      %p125 = scmp.ne.s32.totalorder %s117, %s119
      %p126 = scmp.eq.s32.totalorder %s25, 1
      %p127 = por %p125, %p126
      %p128 = scmp.ne.s32.totalorder %s119, %s120
      %p129 = scmp.eq.s32.totalorder %s25, 0
      %p130 = por %p128, %p129
      %p131 = scmp.ne.s32.totalorder %s119, %s120
      %p132 = scmp.eq.s32.totalorder %s26, 1
      %p133 = por %p131, %p132
      %p135 = scmp.ne.s32.totalorder %s120, %s134
      %p136 = scmp.eq.s32.totalorder %s26, 0
      %p137 = por %p135, %p136
      %s138 = ssub.s32 %s20, %s27
      %p139 = scmp.eq.s32.totalorder %s138, 0
      %s141 = sadd.s32 %s140, 1
      %s142 = scalar_select %p139, %s140, %s141
      %p145 = pneg %p139
      %p146 = scmp.eq.s32.totalorder %s20, 1
      %p147 = por %p145, %p146
      %p148 = scmp.ne.s32.totalorder %s140, %s143
      %p149 = scmp.eq.s32.totalorder %s20, 0
      %p150 = por %p148, %p149
      %p151 = scmp.ne.s32.totalorder %s140, %s143
      %p152 = scmp.eq.s32.totalorder %s25, 1
      %p153 = por %p151, %p152
      %p154 = scmp.ne.s32.totalorder %s143, %s144
      %p155 = scmp.eq.s32.totalorder %s25, 0
      %p156 = por %p154, %p155
      %p157 = scmp.ne.s32.totalorder %s143, %s144
      %p158 = scmp.eq.s32.totalorder %s26, 1
      %p159 = por %p157, %p158
      %p161 = scmp.ne.s32.totalorder %s144, %s160
      %p162 = scmp.eq.s32.totalorder %s26, 0
      %p163 = por %p161, %p162
      %p164 = scmp.le.s32.totalorder 1, %s20
      %p165 = scmp.lt.s32.totalorder %s20, 3
      %p166 = pnand %p164, %p165
      %p167 = pneg %p166
      // Predicated region
      $region9: #{tpu_custom_call.1} parent=5 // pred_check
        _
      $region10: #{tpu_custom_call.1} parent=5 // pred_check_branch
        %169 = sbr.rel (%p166) target = $region12
      $region11: #{tpu_custom_call.1} parent=5 // pred_region
        %s170 = ssub.s32 %s20, 1
        // Predicated region
        $region13: #{tpu_custom_call.1} parent=11 // pred_check
          %p171 = pneg %p67
        $region14: #{tpu_custom_call.1} parent=11 // pred_check_branch
          %173 = sbr.rel (%p171) target = $region16
        $region15: #{tpu_custom_call.1} parent=11 // pred_region
          %175 = vsyncadd [#allocation5], 0
          %s176 = sshll.u32 %s1, 4
          %s177 = int_to_ptr.vmem [resolvable:$true] %s176
          %182 = dma.vmem_to_smem %s177, 256, [#allocation6], [#allocation5], 128, 128, 8
        $region16: #{tpu_custom_call.1} parent=11 // pred_fallthru
          _
        // Predicated region
        $region17: #{tpu_custom_call.1} parent=11 // pred_check
          %p183 = pneg %p88
        $region18: #{tpu_custom_call.1} parent=11 // pred_check_branch
          %185 = sbr.rel (%p183) target = $region20
        $region19: #{tpu_custom_call.1} parent=11 // pred_region
          %187 = vsyncadd [#allocation8], 0
          %s189 = sshll.u32 %s2, 4
          %s190 = int_to_ptr.vmem [resolvable:$true] %s189
          %192 = dma.vmem_to_smem %s190, 16, [#allocation7], [#allocation8]
        $region20: #{tpu_custom_call.1} parent=11 // pred_fallthru
          _
        // Predicated region
        $region21: #{tpu_custom_call.1} parent=11 // pred_check
          %p193 = pneg %p109
        $region22: #{tpu_custom_call.1} parent=11 // pred_check_branch
          %195 = sbr.rel (%p193) target = $region24
        $region23: #{tpu_custom_call.1} parent=11 // pred_region
          %197 = vsyncadd [#allocation8], 0
          %s199 = sshll.u32 %s3, 4
          %s200 = int_to_ptr.vmem [resolvable:$true] %s199
          %202 = dma.vmem_to_smem %s200, 128, [#allocation9], [#allocation8]
        $region24: #{tpu_custom_call.1} parent=11 // pred_fallthru
          _
        // Predicated region
        $region25: #{tpu_custom_call.1} parent=11 // pred_check
          %p203 = pneg %p130
        $region26: #{tpu_custom_call.1} parent=11 // pred_check_branch
          %205 = sbr.rel (%p203) target = $region28
        $region27: #{tpu_custom_call.1} parent=11 // pred_region
          %207 = vsyncadd [#allocation11], 0
          %s209 = sshll.u32 %s4, 4
          %s210 = int_to_ptr.vmem [resolvable:$true] %s209
          %212 = dma.vmem_to_smem %s210, 16, [#allocation10], [#allocation11]
        $region28: #{tpu_custom_call.1} parent=11 // pred_fallthru
          _
      $region12: #{tpu_custom_call.1} parent=5 // pred_fallthru
        _
      %p213 = scmp.lt.s32.totalorder %s20, 2
      // Predicated region
      $region29: #{tpu_custom_call.1} parent=5 // pred_check
        %p214 = pneg %p213
      $region30: #{tpu_custom_call.1} parent=5 // pred_check_branch
        %216 = sbr.rel (%p214) target = $region32
      $region31: #{tpu_custom_call.1} parent=5 // pred_region
        // Predicated region
        $region33: #{tpu_custom_call.1} parent=31 // pred_check
          %p217 = pneg %p40
        $region34: #{tpu_custom_call.1} parent=31 // pred_check_branch
          %219 = sbr.rel (%p217) target = $region36
        $region35: #{tpu_custom_call.1} parent=31 // pred_region
          %s220 = sand.u32 %s30, 1
          %s221 = scalar_lea.sflag [#allocation3], %s220
          %s222 = sand.u32 %s30, 1
          %s223 = smul.addr %s222, 64
          %s224 = scalar_lea.vmem [#allocation2], %s223
          %226 = vsyncadd %s221, 0
          %s227 = smul.addr %s20, 8
          %s228 = smul.addr %s227, 8
          %s229 = scalar_lea.hbm %s0, %s228
          %s230 = sshll.u32 %s229, 4
          %s231 = int_to_ptr.hbm [resolvable:$true] %s230
          %s232 = sshll.u32 %s224, 4
          %s233 = int_to_ptr.vmem [resolvable:$true] %s232
          %238 = dma.hbm_to_vmem [thread:$0]  %s231, 1024, %s233, %s221, 128, 128, 8
        $region36: #{tpu_custom_call.1} parent=31 // pred_fallthru
          _
      $region32: #{tpu_custom_call.1} parent=5 // pred_fallthru
        _
      %p239 = scmp.le.s32.totalorder 1, %s20
      %p240 = scmp.lt.s32.totalorder %s20, 3
      %p241 = pnand %p239, %p240
      %p242 = pneg %p241
      // Predicated region
      $region37: #{tpu_custom_call.1} parent=5 // pred_check
        _
      $region38: #{tpu_custom_call.1} parent=5 // pred_check_branch
        %244 = sbr.rel (%p241) target = $region40
      $region39: #{tpu_custom_call.1} parent=5 // pred_region
        %s245 = ssub.s32 %s20, 1
        %s246 = sand.u32 %s33, 1
        %s247 = scalar_lea.sflag [#allocation3], %s246
        %s248 = sand.u32 %s33, 1
        %s249 = smul.addr %s248, 64
        %s250 = scalar_lea.vmem [#allocation2], %s249
        // Predicated region
        $region41: #{tpu_custom_call.1} parent=39 // pred_check
          %p251 = pneg %p46
        $region42: #{tpu_custom_call.1} parent=39 // pred_check_branch
          %253 = sbr.rel (%p251) target = $region44
        $region43: #{tpu_custom_call.1} parent=39 // pred_region
          %255 = dma.done %s247, 1024
        $region44: #{tpu_custom_call.1} parent=39 // pred_fallthru
          _
        // Predicated region
        $region45: #{tpu_custom_call.1} parent=39 // pred_check
          %p256 = pneg %p67
        $region46: #{tpu_custom_call.1} parent=39 // pred_check_branch
          %258 = sbr.rel (%p256) target = $region48
        $region47: #{tpu_custom_call.1} parent=39 // pred_region
          %260 = dma.done [#allocation5], 256
        $region48: #{tpu_custom_call.1} parent=39 // pred_fallthru
          _
        // Predicated region
        $region49: #{tpu_custom_call.1} parent=39 // pred_check
          %p261 = pneg %p88
        $region50: #{tpu_custom_call.1} parent=39 // pred_check_branch
          %263 = sbr.rel (%p261) target = $region52
        $region51: #{tpu_custom_call.1} parent=39 // pred_region
          %265 = dma.done [#allocation8], 16
        $region52: #{tpu_custom_call.1} parent=39 // pred_fallthru
          _
        // Predicated region
        $region53: #{tpu_custom_call.1} parent=39 // pred_check
          %p266 = pneg %p109
        $region54: #{tpu_custom_call.1} parent=39 // pred_check_branch
          %268 = sbr.rel (%p266) target = $region56
        $region55: #{tpu_custom_call.1} parent=39 // pred_region
          %270 = dma.done [#allocation8], 128
        $region56: #{tpu_custom_call.1} parent=39 // pred_fallthru
          _
        // Predicated region
        $region57: #{tpu_custom_call.1} parent=39 // pred_check
          %p271 = pneg %p130
        $region58: #{tpu_custom_call.1} parent=39 // pred_check_branch
          %273 = sbr.rel (%p271) target = $region60
        $region59: #{tpu_custom_call.1} parent=39 // pred_region
          %275 = dma.done [#allocation11], 16
        $region60: #{tpu_custom_call.1} parent=39 // pred_fallthru
          _
        %276 = sfence
        %s277 = sand.u32 %s33, 1
        %s278 = scalar_lea.sflag [#allocation3], %s277
        %s279 = sand.u32 %s33, 1
        %s280 = smul.addr %s279, 64
        %s281 = scalar_lea.vmem [#allocation2], %s280
        %p282 = pneg %p46
        %p283 = pneg %p43
        %p284 = pneg %p67
        %p285 = pneg %p64
        %p286 = pneg %p88
        %p287 = pneg %p85
        %p288 = pneg %p109
        %p289 = pneg %p106
        %p290 = pneg %p130
        %p291 = pneg %p127
        %p292 = pneg %p156
        %p293 = pneg %p153
        %s294 = sand.u32 %s143, 1
        %s295 = scalar_lea.sflag [#allocation4], %s294
        %s296 = sand.u32 %s143, 1
        %s297 = smul.addr %s296, 128
        %s298 = scalar_lea.vmem [#allocation12], %s297
        %v299 = vld [vmem:[%s250] sm:$0xff]
        %v300 = vld [vmem:[%s250 + $0x8] sm:$0xff]
        %vm303 = vcmask 1040384
        %v304 = vrot.slane %v299, 7
        %v305 = vrot.slane %v300, 7
        %v306 = vsel %vm303, %v304, %v305
        %v309 = vsel %vm303, 0.0, %v304
        %vm310 = vcmask 1046528
        %v311 = vrot.slane %v299, 1
        %v312 = vrot.slane %v300, 1
        %v313 = vsel %vm310, %v311, %v312
        %v316 = vsel %vm310, %v312, 0.0
        %318 = vrot.lane.b32.xlu0 %v309, 1
        %v319 = vpop.permute.xlu0 %318
        %320 = vrot.lane.b32.xlu0 %v306, 1
        %v321 = vpop.permute.xlu0 %320
        %vm324 = vcmask 7168
        %v325 = vsel %vm324, 0.0, %v319
        %v326 = vsel %vm324, 0.0, %v321
        %327 = vrot.lane.b32.xlu0 %v309, 127
        %v328 = vpop.permute.xlu0 %327
        %329 = vrot.lane.b32.xlu0 %v306, 127
        %v330 = vpop.permute.xlu0 %329
        %vm333 = vcmask 121856
        %v334 = vsel %vm333, %v328, 0.0
        %v335 = vsel %vm333, %v330, 0.0
        %s336 = sld [smem:[#allocation6]]
        %v337 = vstv %s336
        %v338 = vmul.f32 %v325, %v337
        %v339 = vmul.f32 %v326, %v337
        %s340 = sld [smem:[#allocation6 + $0x80]]
        %v341 = vstv %s340
        %v342 = vmul.f32 %v309, %v341
        %v343 = vmul.f32 %v306, %v341
        %v344 = vadd.f32 %v338, %v342
        %v345 = vadd.f32 %v339, %v343
        %s346 = sld [smem:[#allocation6 + $0x100]]
        %v347 = vstv %s346
        %v348 = vmul.f32 %v334, %v347
        %v349 = vmul.f32 %v335, %v347
        %v350 = vadd.f32 %v344, %v348
        %v351 = vadd.f32 %v345, %v349
        %352 = vrot.lane.b32.xlu0 %v299, 1
        %v353 = vpop.permute.xlu0 %352
        %354 = vrot.lane.b32.xlu0 %v300, 1
        %v355 = vpop.permute.xlu0 %354
        %v358 = vsel %vm324, 0.0, %v353
        %v359 = vsel %vm324, 0.0, %v355
        %360 = vrot.lane.b32.xlu0 %v299, 127
        %v361 = vpop.permute.xlu0 %360
        %362 = vrot.lane.b32.xlu0 %v300, 127
        %v363 = vpop.permute.xlu0 %362
        %v366 = vsel %vm333, %v361, 0.0
        %v367 = vsel %vm333, %v363, 0.0
        %s368 = sld [smem:[#allocation6 + $0x180]]
        %v369 = vstv %s368
        %v370 = vmul.f32 %v358, %v369
        %v371 = vmul.f32 %v359, %v369
        %v372 = vadd.f32 %v350, %v370
        %v373 = vadd.f32 %v351, %v371
        %s374 = sld [smem:[#allocation6 + $0x200]]
        %v375 = vstv %s374
        %v376 = vmul.f32 %v299, %v375
        %v377 = vmul.f32 %v300, %v375
        %v378 = vadd.f32 %v372, %v376
        %v379 = vadd.f32 %v373, %v377
        %s380 = sld [smem:[#allocation6 + $0x280]]
        %v381 = vstv %s380
        %v382 = vmul.f32 %v366, %v381
        %v383 = vmul.f32 %v367, %v381
        %v384 = vadd.f32 %v378, %v382
        %v385 = vadd.f32 %v379, %v383
        %387 = vrot.lane.b32.xlu0 %v313, 1
        %v388 = vpop.permute.xlu0 %387
        %389 = vrot.lane.b32.xlu0 %v316, 1
        %v390 = vpop.permute.xlu0 %389
        %v393 = vsel %vm324, 0.0, %v388
        %v394 = vsel %vm324, 0.0, %v390
        %395 = vrot.lane.b32.xlu0 %v313, 127
        %v396 = vpop.permute.xlu0 %395
        %397 = vrot.lane.b32.xlu0 %v316, 127
        %v398 = vpop.permute.xlu0 %397
        %v401 = vsel %vm333, %v396, 0.0
        %v402 = vsel %vm333, %v398, 0.0
        %s403 = sld [smem:[#allocation6 + $0x300]]
        %v404 = vstv %s403
        %v405 = vmul.f32 %v393, %v404
        %v406 = vmul.f32 %v394, %v404
        %v407 = vadd.f32 %v384, %v405
        %v408 = vadd.f32 %v385, %v406
        %s409 = sld [smem:[#allocation6 + $0x380]]
        %v410 = vstv %s409
        %v411 = vmul.f32 %v313, %v410
        %v412 = vmul.f32 %v316, %v410
        %v413 = vadd.f32 %v407, %v411
        %v414 = vadd.f32 %v408, %v412
        %s415 = sld [smem:[#allocation6 + $0x400]]
        %v416 = vstv %s415
        %v417 = vmul.f32 %v401, %v416
        %v418 = vmul.f32 %v402, %v416
        %v419 = vadd.f32 %v413, %v417
        %v420 = vadd.f32 %v414, %v418
        %s421 = sld [smem:[#allocation7]]
        %v422 = vstv %s421
        %v423 = vadd.f32 %v419, %v422
        %v424 = vadd.f32 %v420, %v422
        %s425 = sld [smem:[#allocation9]]
        %v426 = vstv %s425
        %v427 = vmul.f32 %v423, %v426
        %v428 = vmul.f32 %v424, %v426
        %s429 = sld [smem:[#allocation9 + $0x80]]
        %v430 = vstv %s429
        %v431 = vmul.f32 %v423, %v430
        %v432 = vmul.f32 %v424, %v430
        %s433 = sld [smem:[#allocation9 + $0x100]]
        %v434 = vstv %s433
        %v435 = vmul.f32 %v423, %v434
        %v436 = vmul.f32 %v424, %v434
        %s437 = sld [smem:[#allocation9 + $0x180]]
        %v438 = vstv %s437
        %v439 = vmul.f32 %v423, %v438
        %v440 = vmul.f32 %v424, %v438
        %s441 = sld [smem:[#allocation9 + $0x200]]
        %v442 = vstv %s441
        %v443 = vmul.f32 %v423, %v442
        %v444 = vmul.f32 %v424, %v442
        %s445 = sld [smem:[#allocation9 + $0x280]]
        %v446 = vstv %s445
        %v447 = vmul.f32 %v423, %v446
        %v448 = vmul.f32 %v424, %v446
        %s449 = sld [smem:[#allocation9 + $0x300]]
        %v450 = vstv %s449
        %v451 = vmul.f32 %v423, %v450
        %v452 = vmul.f32 %v424, %v450
        %s453 = sld [smem:[#allocation9 + $0x380]]
        %v454 = vstv %s453
        %v455 = vmul.f32 %v423, %v454
        %v456 = vmul.f32 %v424, %v454
        %s457 = scalar_lea.vmem %s250, 16 [#allocation2]
        %v458 = vld [vmem:[%s457] sm:$0xff]
        %v459 = vld [vmem:[%s457 + $0x8] sm:$0xff]
        %v462 = vrot.slane %v458, 7
        %v463 = vrot.slane %v459, 7
        %v464 = vsel %vm303, %v462, %v463
        %v467 = vsel %vm303, 0.0, %v462
        %v468 = vrot.slane %v458, 1
        %v469 = vrot.slane %v459, 1
        %v470 = vsel %vm310, %v468, %v469
        %v473 = vsel %vm310, %v469, 0.0
        %475 = vrot.lane.b32.xlu0 %v467, 1
        %v476 = vpop.permute.xlu0 %475
        %477 = vrot.lane.b32.xlu0 %v464, 1
        %v478 = vpop.permute.xlu0 %477
        %v481 = vsel %vm324, 0.0, %v476
        %v482 = vsel %vm324, 0.0, %v478
        %483 = vrot.lane.b32.xlu0 %v467, 127
        %v484 = vpop.permute.xlu0 %483
        %485 = vrot.lane.b32.xlu0 %v464, 127
        %v486 = vpop.permute.xlu0 %485
        %v489 = vsel %vm333, %v484, 0.0
        %v490 = vsel %vm333, %v486, 0.0
        %s491 = sld [smem:[#allocation6 + $0x1]]
        %v492 = vstv %s491
        %v493 = vmul.f32 %v481, %v492
        %v494 = vmul.f32 %v482, %v492
        %s495 = sld [smem:[#allocation6 + $0x81]]
        %v496 = vstv %s495
        %v497 = vmul.f32 %v467, %v496
        %v498 = vmul.f32 %v464, %v496
        %v499 = vadd.f32 %v493, %v497
        %v500 = vadd.f32 %v494, %v498
        %s501 = sld [smem:[#allocation6 + $0x101]]
        %v502 = vstv %s501
        %v503 = vmul.f32 %v489, %v502
        %v504 = vmul.f32 %v490, %v502
        %v505 = vadd.f32 %v499, %v503
        %v506 = vadd.f32 %v500, %v504
        %507 = vrot.lane.b32.xlu0 %v458, 1
        %v508 = vpop.permute.xlu0 %507
        %509 = vrot.lane.b32.xlu0 %v459, 1
        %v510 = vpop.permute.xlu0 %509
        %v513 = vsel %vm324, 0.0, %v508
        %v514 = vsel %vm324, 0.0, %v510
        %515 = vrot.lane.b32.xlu0 %v458, 127
        %v516 = vpop.permute.xlu0 %515
        %517 = vrot.lane.b32.xlu0 %v459, 127
        %v518 = vpop.permute.xlu0 %517
        %v521 = vsel %vm333, %v516, 0.0
        %v522 = vsel %vm333, %v518, 0.0
        %s523 = sld [smem:[#allocation6 + $0x181]]
        %v524 = vstv %s523
        %v525 = vmul.f32 %v513, %v524
        %v526 = vmul.f32 %v514, %v524
        %v527 = vadd.f32 %v505, %v525
        %v528 = vadd.f32 %v506, %v526
        %s529 = sld [smem:[#allocation6 + $0x201]]
        %v530 = vstv %s529
        %v531 = vmul.f32 %v458, %v530
        %v532 = vmul.f32 %v459, %v530
        %v533 = vadd.f32 %v527, %v531
        %v534 = vadd.f32 %v528, %v532
        %s535 = sld [smem:[#allocation6 + $0x281]]
        %v536 = vstv %s535
        %v537 = vmul.f32 %v521, %v536
        %v538 = vmul.f32 %v522, %v536
        %v539 = vadd.f32 %v533, %v537
        %v540 = vadd.f32 %v534, %v538
        %542 = vrot.lane.b32.xlu0 %v470, 1
        %v543 = vpop.permute.xlu0 %542
        %544 = vrot.lane.b32.xlu0 %v473, 1
        %v545 = vpop.permute.xlu0 %544
        %v548 = vsel %vm324, 0.0, %v543
        %v549 = vsel %vm324, 0.0, %v545
        %550 = vrot.lane.b32.xlu0 %v470, 127
        %v551 = vpop.permute.xlu0 %550
        %552 = vrot.lane.b32.xlu0 %v473, 127
        %v553 = vpop.permute.xlu0 %552
        %v556 = vsel %vm333, %v551, 0.0
        %v557 = vsel %vm333, %v553, 0.0
        %s558 = sld [smem:[#allocation6 + $0x301]]
        %v559 = vstv %s558
        %v560 = vmul.f32 %v548, %v559
        %v561 = vmul.f32 %v549, %v559
        %v562 = vadd.f32 %v539, %v560
        %v563 = vadd.f32 %v540, %v561
        %s564 = sld [smem:[#allocation6 + $0x381]]
        %v565 = vstv %s564
        %v566 = vmul.f32 %v470, %v565
        %v567 = vmul.f32 %v473, %v565
        %v568 = vadd.f32 %v562, %v566
        %v569 = vadd.f32 %v563, %v567
        %s570 = sld [smem:[#allocation6 + $0x401]]
        %v571 = vstv %s570
        %v572 = vmul.f32 %v556, %v571
        %v573 = vmul.f32 %v557, %v571
        %v574 = vadd.f32 %v568, %v572
        %v575 = vadd.f32 %v569, %v573
        %s576 = sld [smem:[#allocation7 + $0x1]]
        %v577 = vstv %s576
        %v578 = vadd.f32 %v574, %v577
        %v579 = vadd.f32 %v575, %v577
        %s580 = sld [smem:[#allocation9 + $0x1]]
        %v581 = vstv %s580
        %v582 = vmul.f32 %v578, %v581
        %v583 = vmul.f32 %v579, %v581
        %v584 = vadd.f32 %v427, %v582
        %v585 = vadd.f32 %v428, %v583
        %s586 = sld [smem:[#allocation9 + $0x81]]
        %v587 = vstv %s586
        %v588 = vmul.f32 %v578, %v587
        %v589 = vmul.f32 %v579, %v587
        %v590 = vadd.f32 %v431, %v588
        %v591 = vadd.f32 %v432, %v589
        %s592 = sld [smem:[#allocation9 + $0x101]]
        %v593 = vstv %s592
        %v594 = vmul.f32 %v578, %v593
        %v595 = vmul.f32 %v579, %v593
        %v596 = vadd.f32 %v435, %v594
        %v597 = vadd.f32 %v436, %v595
        %s598 = sld [smem:[#allocation9 + $0x181]]
        %v599 = vstv %s598
        %v600 = vmul.f32 %v578, %v599
        %v601 = vmul.f32 %v579, %v599
        %v602 = vadd.f32 %v439, %v600
        %v603 = vadd.f32 %v440, %v601
        %s604 = sld [smem:[#allocation9 + $0x201]]
        %v605 = vstv %s604
        %v606 = vmul.f32 %v578, %v605
        %v607 = vmul.f32 %v579, %v605
        %v608 = vadd.f32 %v443, %v606
        %v609 = vadd.f32 %v444, %v607
        %s610 = sld [smem:[#allocation9 + $0x281]]
        %v611 = vstv %s610
        %v612 = vmul.f32 %v578, %v611
        %v613 = vmul.f32 %v579, %v611
        %v614 = vadd.f32 %v447, %v612
        %v615 = vadd.f32 %v448, %v613
        %s616 = sld [smem:[#allocation9 + $0x301]]
        %v617 = vstv %s616
        %v618 = vmul.f32 %v578, %v617
        %v619 = vmul.f32 %v579, %v617
        %v620 = vadd.f32 %v451, %v618
        %v621 = vadd.f32 %v452, %v619
        %s622 = sld [smem:[#allocation9 + $0x381]]
        %v623 = vstv %s622
        %v624 = vmul.f32 %v578, %v623
        %v625 = vmul.f32 %v579, %v623
        %v626 = vadd.f32 %v455, %v624
        %v627 = vadd.f32 %v456, %v625
        %s628 = scalar_lea.vmem %s250, 32 [#allocation2]
        %v629 = vld [vmem:[%s628] sm:$0xff]
        %v630 = vld [vmem:[%s628 + $0x8] sm:$0xff]
        %v633 = vrot.slane %v629, 7
        %v634 = vrot.slane %v630, 7
        %v635 = vsel %vm303, %v633, %v634
        %v638 = vsel %vm303, 0.0, %v633
        %v639 = vrot.slane %v629, 1
        %v640 = vrot.slane %v630, 1
        %v641 = vsel %vm310, %v639, %v640
        %v644 = vsel %vm310, %v640, 0.0
        %646 = vrot.lane.b32.xlu0 %v638, 1
        %v647 = vpop.permute.xlu0 %646
        %648 = vrot.lane.b32.xlu0 %v635, 1
        %v649 = vpop.permute.xlu0 %648
        %v652 = vsel %vm324, 0.0, %v647
        %v653 = vsel %vm324, 0.0, %v649
        %654 = vrot.lane.b32.xlu0 %v638, 127
        %v655 = vpop.permute.xlu0 %654
        %656 = vrot.lane.b32.xlu0 %v635, 127
        %v657 = vpop.permute.xlu0 %656
        %v660 = vsel %vm333, %v655, 0.0
        %v661 = vsel %vm333, %v657, 0.0
        %s662 = sld [smem:[#allocation6 + $0x2]]
        %v663 = vstv %s662
        %v664 = vmul.f32 %v652, %v663
        %v665 = vmul.f32 %v653, %v663
        %s666 = sld [smem:[#allocation6 + $0x82]]
        %v667 = vstv %s666
        %v668 = vmul.f32 %v638, %v667
        %v669 = vmul.f32 %v635, %v667
        %v670 = vadd.f32 %v664, %v668
        %v671 = vadd.f32 %v665, %v669
        %s672 = sld [smem:[#allocation6 + $0x102]]
        %v673 = vstv %s672
        %v674 = vmul.f32 %v660, %v673
        %v675 = vmul.f32 %v661, %v673
        %v676 = vadd.f32 %v670, %v674
        %v677 = vadd.f32 %v671, %v675
        %678 = vrot.lane.b32.xlu0 %v629, 1
        %v679 = vpop.permute.xlu0 %678
        %680 = vrot.lane.b32.xlu0 %v630, 1
        %v681 = vpop.permute.xlu0 %680
        %v684 = vsel %vm324, 0.0, %v679
        %v685 = vsel %vm324, 0.0, %v681
        %686 = vrot.lane.b32.xlu0 %v629, 127
        %v687 = vpop.permute.xlu0 %686
        %688 = vrot.lane.b32.xlu0 %v630, 127
        %v689 = vpop.permute.xlu0 %688
        %v692 = vsel %vm333, %v687, 0.0
        %v693 = vsel %vm333, %v689, 0.0
        %s694 = sld [smem:[#allocation6 + $0x182]]
        %v695 = vstv %s694
        %v696 = vmul.f32 %v684, %v695
        %v697 = vmul.f32 %v685, %v695
        %v698 = vadd.f32 %v676, %v696
        %v699 = vadd.f32 %v677, %v697
        %s700 = sld [smem:[#allocation6 + $0x202]]
        %v701 = vstv %s700
        %v702 = vmul.f32 %v629, %v701
        %v703 = vmul.f32 %v630, %v701
        %v704 = vadd.f32 %v698, %v702
        %v705 = vadd.f32 %v699, %v703
        %s706 = sld [smem:[#allocation6 + $0x282]]
        %v707 = vstv %s706
        %v708 = vmul.f32 %v692, %v707
        %v709 = vmul.f32 %v693, %v707
        %v710 = vadd.f32 %v704, %v708
        %v711 = vadd.f32 %v705, %v709
        %713 = vrot.lane.b32.xlu0 %v641, 1
        %v714 = vpop.permute.xlu0 %713
        %715 = vrot.lane.b32.xlu0 %v644, 1
        %v716 = vpop.permute.xlu0 %715
        %v719 = vsel %vm324, 0.0, %v714
        %v720 = vsel %vm324, 0.0, %v716
        %721 = vrot.lane.b32.xlu0 %v641, 127
        %v722 = vpop.permute.xlu0 %721
        %723 = vrot.lane.b32.xlu0 %v644, 127
        %v724 = vpop.permute.xlu0 %723
        %v727 = vsel %vm333, %v722, 0.0
        %v728 = vsel %vm333, %v724, 0.0
        %s729 = sld [smem:[#allocation6 + $0x302]]
        %v730 = vstv %s729
        %v731 = vmul.f32 %v719, %v730
        %v732 = vmul.f32 %v720, %v730
        %v733 = vadd.f32 %v710, %v731
        %v734 = vadd.f32 %v711, %v732
        %s735 = sld [smem:[#allocation6 + $0x382]]
        %v736 = vstv %s735
        %v737 = vmul.f32 %v641, %v736
        %v738 = vmul.f32 %v644, %v736
        %v739 = vadd.f32 %v733, %v737
        %v740 = vadd.f32 %v734, %v738
        %s741 = sld [smem:[#allocation6 + $0x402]]
        %v742 = vstv %s741
        %v743 = vmul.f32 %v727, %v742
        %v744 = vmul.f32 %v728, %v742
        %v745 = vadd.f32 %v739, %v743
        %v746 = vadd.f32 %v740, %v744
        %s747 = sld [smem:[#allocation7 + $0x2]]
        %v748 = vstv %s747
        %v749 = vadd.f32 %v745, %v748
        %v750 = vadd.f32 %v746, %v748
        %s751 = sld [smem:[#allocation9 + $0x2]]
        %v752 = vstv %s751
        %v753 = vmul.f32 %v749, %v752
        %v754 = vmul.f32 %v750, %v752
        %v755 = vadd.f32 %v584, %v753
        %v756 = vadd.f32 %v585, %v754
        %s757 = sld [smem:[#allocation9 + $0x82]]
        %v758 = vstv %s757
        %v759 = vmul.f32 %v749, %v758
        %v760 = vmul.f32 %v750, %v758
        %v761 = vadd.f32 %v590, %v759
        %v762 = vadd.f32 %v591, %v760
        %s763 = sld [smem:[#allocation9 + $0x102]]
        %v764 = vstv %s763
        %v765 = vmul.f32 %v749, %v764
        %v766 = vmul.f32 %v750, %v764
        %v767 = vadd.f32 %v596, %v765
        %v768 = vadd.f32 %v597, %v766
        %s769 = sld [smem:[#allocation9 + $0x182]]
        %v770 = vstv %s769
        %v771 = vmul.f32 %v749, %v770
        %v772 = vmul.f32 %v750, %v770
        %v773 = vadd.f32 %v602, %v771
        %v774 = vadd.f32 %v603, %v772
        %s775 = sld [smem:[#allocation9 + $0x202]]
        %v776 = vstv %s775
        %v777 = vmul.f32 %v749, %v776
        %v778 = vmul.f32 %v750, %v776
        %v779 = vadd.f32 %v608, %v777
        %v780 = vadd.f32 %v609, %v778
        %s781 = sld [smem:[#allocation9 + $0x282]]
        %v782 = vstv %s781
        %v783 = vmul.f32 %v749, %v782
        %v784 = vmul.f32 %v750, %v782
        %v785 = vadd.f32 %v614, %v783
        %v786 = vadd.f32 %v615, %v784
        %s787 = sld [smem:[#allocation9 + $0x302]]
        %v788 = vstv %s787
        %v789 = vmul.f32 %v749, %v788
        %v790 = vmul.f32 %v750, %v788
        %v791 = vadd.f32 %v620, %v789
        %v792 = vadd.f32 %v621, %v790
        %s793 = sld [smem:[#allocation9 + $0x382]]
        %v794 = vstv %s793
        %v795 = vmul.f32 %v749, %v794
        %v796 = vmul.f32 %v750, %v794
        %v797 = vadd.f32 %v626, %v795
        %v798 = vadd.f32 %v627, %v796
        %s799 = scalar_lea.vmem %s250, 48 [#allocation2]
        %v800 = vld [vmem:[%s799] sm:$0xff]
        %v801 = vld [vmem:[%s799 + $0x8] sm:$0xff]
        %v804 = vrot.slane %v800, 7
        %v805 = vrot.slane %v801, 7
        %v806 = vsel %vm303, %v804, %v805
        %v809 = vsel %vm303, 0.0, %v804
        %v810 = vrot.slane %v800, 1
        %v811 = vrot.slane %v801, 1
        %v812 = vsel %vm310, %v810, %v811
        %v815 = vsel %vm310, %v811, 0.0
        %817 = vrot.lane.b32.xlu0 %v809, 1
        %v818 = vpop.permute.xlu0 %817
        %819 = vrot.lane.b32.xlu0 %v806, 1
        %v820 = vpop.permute.xlu0 %819
        %v823 = vsel %vm324, 0.0, %v818
        %v824 = vsel %vm324, 0.0, %v820
        %825 = vrot.lane.b32.xlu0 %v809, 127
        %v826 = vpop.permute.xlu0 %825
        %827 = vrot.lane.b32.xlu0 %v806, 127
        %v828 = vpop.permute.xlu0 %827
        %v831 = vsel %vm333, %v826, 0.0
        %v832 = vsel %vm333, %v828, 0.0
        %s833 = sld [smem:[#allocation6 + $0x3]]
        %v834 = vstv %s833
        %v835 = vmul.f32 %v823, %v834
        %v836 = vmul.f32 %v824, %v834
        %s837 = sld [smem:[#allocation6 + $0x83]]
        %v838 = vstv %s837
        %v839 = vmul.f32 %v809, %v838
        %v840 = vmul.f32 %v806, %v838
        %v841 = vadd.f32 %v835, %v839
        %v842 = vadd.f32 %v836, %v840
        %s843 = sld [smem:[#allocation6 + $0x103]]
        %v844 = vstv %s843
        %v845 = vmul.f32 %v831, %v844
        %v846 = vmul.f32 %v832, %v844
        %v847 = vadd.f32 %v841, %v845
        %v848 = vadd.f32 %v842, %v846
        %849 = vrot.lane.b32.xlu0 %v800, 1
        %v850 = vpop.permute.xlu0 %849
        %851 = vrot.lane.b32.xlu0 %v801, 1
        %v852 = vpop.permute.xlu0 %851
        %v855 = vsel %vm324, 0.0, %v850
        %v856 = vsel %vm324, 0.0, %v852
        %857 = vrot.lane.b32.xlu0 %v800, 127
        %v858 = vpop.permute.xlu0 %857
        %859 = vrot.lane.b32.xlu0 %v801, 127
        %v860 = vpop.permute.xlu0 %859
        %v863 = vsel %vm333, %v858, 0.0
        %v864 = vsel %vm333, %v860, 0.0
        %s865 = sld [smem:[#allocation6 + $0x183]]
        %v866 = vstv %s865
        %v867 = vmul.f32 %v855, %v866
        %v868 = vmul.f32 %v856, %v866
        %v869 = vadd.f32 %v847, %v867
        %v870 = vadd.f32 %v848, %v868
        %s871 = sld [smem:[#allocation6 + $0x203]]
        %v872 = vstv %s871
        %v873 = vmul.f32 %v800, %v872
        %v874 = vmul.f32 %v801, %v872
        %v875 = vadd.f32 %v869, %v873
        %v876 = vadd.f32 %v870, %v874
        %s877 = sld [smem:[#allocation6 + $0x283]]
        %v878 = vstv %s877
        %v879 = vmul.f32 %v863, %v878
        %v880 = vmul.f32 %v864, %v878
        %v881 = vadd.f32 %v875, %v879
        %v882 = vadd.f32 %v876, %v880
        %884 = vrot.lane.b32.xlu0 %v812, 1
        %v885 = vpop.permute.xlu0 %884
        %886 = vrot.lane.b32.xlu0 %v815, 1
        %v887 = vpop.permute.xlu0 %886
        %v890 = vsel %vm324, 0.0, %v885
        %v891 = vsel %vm324, 0.0, %v887
        %892 = vrot.lane.b32.xlu0 %v812, 127
        %v893 = vpop.permute.xlu0 %892
        %894 = vrot.lane.b32.xlu0 %v815, 127
        %v895 = vpop.permute.xlu0 %894
        %v898 = vsel %vm333, %v893, 0.0
        %v899 = vsel %vm333, %v895, 0.0
        %s900 = sld [smem:[#allocation6 + $0x303]]
        %v901 = vstv %s900
        %v902 = vmul.f32 %v890, %v901
        %v903 = vmul.f32 %v891, %v901
        %v904 = vadd.f32 %v881, %v902
        %v905 = vadd.f32 %v882, %v903
        %s906 = sld [smem:[#allocation6 + $0x383]]
        %v907 = vstv %s906
        %v908 = vmul.f32 %v812, %v907
        %v909 = vmul.f32 %v815, %v907
        %v910 = vadd.f32 %v904, %v908
        %v911 = vadd.f32 %v905, %v909
        %s912 = sld [smem:[#allocation6 + $0x403]]
        %v913 = vstv %s912
        %v914 = vmul.f32 %v898, %v913
        %v915 = vmul.f32 %v899, %v913
        %v916 = vadd.f32 %v910, %v914
        %v917 = vadd.f32 %v911, %v915
        %s918 = sld [smem:[#allocation7 + $0x3]]
        %v919 = vstv %s918
        %v920 = vadd.f32 %v916, %v919
        %v921 = vadd.f32 %v917, %v919
        %s922 = sld [smem:[#allocation9 + $0x3]]
        %v923 = vstv %s922
        %v924 = vmul.f32 %v920, %v923
        %v925 = vmul.f32 %v921, %v923
        %v926 = vadd.f32 %v755, %v924
        %v927 = vadd.f32 %v756, %v925
        %s928 = sld [smem:[#allocation9 + $0x83]]
        %v929 = vstv %s928
        %v930 = vmul.f32 %v920, %v929
        %v931 = vmul.f32 %v921, %v929
        %v932 = vadd.f32 %v761, %v930
        %v933 = vadd.f32 %v762, %v931
        %s934 = sld [smem:[#allocation9 + $0x103]]
        %v935 = vstv %s934
        %v936 = vmul.f32 %v920, %v935
        %v937 = vmul.f32 %v921, %v935
        %v938 = vadd.f32 %v767, %v936
        %v939 = vadd.f32 %v768, %v937
        %s940 = sld [smem:[#allocation9 + $0x183]]
        %v941 = vstv %s940
        %v942 = vmul.f32 %v920, %v941
        %v943 = vmul.f32 %v921, %v941
        %v944 = vadd.f32 %v773, %v942
        %v945 = vadd.f32 %v774, %v943
        %s946 = sld [smem:[#allocation9 + $0x203]]
        %v947 = vstv %s946
        %v948 = vmul.f32 %v920, %v947
        %v949 = vmul.f32 %v921, %v947
        %v950 = vadd.f32 %v779, %v948
        %v951 = vadd.f32 %v780, %v949
        %s952 = sld [smem:[#allocation9 + $0x283]]
        %v953 = vstv %s952
        %v954 = vmul.f32 %v920, %v953
        %v955 = vmul.f32 %v921, %v953
        %v956 = vadd.f32 %v785, %v954
        %v957 = vadd.f32 %v786, %v955
        %s958 = sld [smem:[#allocation9 + $0x303]]
        %v959 = vstv %s958
        %v960 = vmul.f32 %v920, %v959
        %v961 = vmul.f32 %v921, %v959
        %v962 = vadd.f32 %v791, %v960
        %v963 = vadd.f32 %v792, %v961
        %s964 = sld [smem:[#allocation9 + $0x383]]
        %v965 = vstv %s964
        %v966 = vmul.f32 %v920, %v965
        %v967 = vmul.f32 %v921, %v965
        %v968 = vadd.f32 %v797, %v966
        %v969 = vadd.f32 %v798, %v967
        %s970 = sld [smem:[#allocation10]]
        %v971 = vstv %s970
        %v972 = vadd.f32 %v926, %v971
        %v973 = vadd.f32 %v927, %v971
        %vm974 = vcmask 130048
        %975 = vst.msk [vmem:[%s298] sm:$0xff] %vm974, %v972
        %976 = vst.msk [vmem:[%s298 + $0x8] sm:$0xff] %vm974, %v973
        %s977 = sld [smem:[#allocation10 + $0x1]]
        %v978 = vstv %s977
        %v979 = vadd.f32 %v932, %v978
        %v980 = vadd.f32 %v933, %v978
        %s981 = scalar_lea.vmem %s298, 16 [#allocation12]
        %982 = vst.msk [vmem:[%s981] sm:$0xff] %vm974, %v979
        %983 = vst.msk [vmem:[%s981 + $0x8] sm:$0xff] %vm974, %v980
        %s984 = sld [smem:[#allocation10 + $0x2]]
        %v985 = vstv %s984
        %v986 = vadd.f32 %v938, %v985
        %v987 = vadd.f32 %v939, %v985
        %s988 = scalar_lea.vmem %s298, 32 [#allocation12]
        %989 = vst.msk [vmem:[%s988] sm:$0xff] %vm974, %v986
        %990 = vst.msk [vmem:[%s988 + $0x8] sm:$0xff] %vm974, %v987
        %s991 = sld [smem:[#allocation10 + $0x3]]
        %v992 = vstv %s991
        %v993 = vadd.f32 %v944, %v992
        %v994 = vadd.f32 %v945, %v992
        %s995 = scalar_lea.vmem %s298, 48 [#allocation12]
        %996 = vst.msk [vmem:[%s995] sm:$0xff] %vm974, %v993
        %997 = vst.msk [vmem:[%s995 + $0x8] sm:$0xff] %vm974, %v994
        %s998 = sld [smem:[#allocation10 + $0x4]]
        %v999 = vstv %s998
        %v1000 = vadd.f32 %v950, %v999
        %v1001 = vadd.f32 %v951, %v999
        %s1002 = scalar_lea.vmem %s298, 64 [#allocation12]
        %1003 = vst.msk [vmem:[%s1002] sm:$0xff] %vm974, %v1000
        %1004 = vst.msk [vmem:[%s1002 + $0x8] sm:$0xff] %vm974, %v1001
        %s1005 = sld [smem:[#allocation10 + $0x5]]
        %v1006 = vstv %s1005
        %v1007 = vadd.f32 %v956, %v1006
        %v1008 = vadd.f32 %v957, %v1006
        %s1009 = scalar_lea.vmem %s298, 80 [#allocation12]
        %1010 = vst.msk [vmem:[%s1009] sm:$0xff] %vm974, %v1007
        %1011 = vst.msk [vmem:[%s1009 + $0x8] sm:$0xff] %vm974, %v1008
        %s1012 = sld [smem:[#allocation10 + $0x6]]
        %v1013 = vstv %s1012
        %v1014 = vadd.f32 %v962, %v1013
        %v1015 = vadd.f32 %v963, %v1013
        %s1016 = scalar_lea.vmem %s298, 96 [#allocation12]
        %1017 = vst.msk [vmem:[%s1016] sm:$0xff] %vm974, %v1014
        %1018 = vst.msk [vmem:[%s1016 + $0x8] sm:$0xff] %vm974, %v1015
        %s1019 = sld [smem:[#allocation10 + $0x7]]
        %v1020 = vstv %s1019
        %v1021 = vadd.f32 %v968, %v1020
        %v1022 = vadd.f32 %v969, %v1020
        %s1023 = scalar_lea.vmem %s298, 112 [#allocation12]
        %1024 = vst.msk [vmem:[%s1023] sm:$0xff] %vm974, %v1021
        %1025 = vst.msk [vmem:[%s1023 + $0x8] sm:$0xff] %vm974, %v1022
        %s1026 = sand.u32 %s143, 1
        %s1027 = scalar_lea.sflag [#allocation4], %s1026
        %s1028 = sand.u32 %s143, 1
        %s1029 = smul.addr %s1028, 128
        %s1030 = scalar_lea.vmem [#allocation12], %s1029
        // Predicated region
        $region61: #{tpu_custom_call.1} parent=39 // pred_check
          %p1031 = pneg %p153
        $region62: #{tpu_custom_call.1} parent=39 // pred_check_branch
          %1033 = sbr.rel (%p1031) target = $region64
        $region63: #{tpu_custom_call.1} parent=39 // pred_region
          %1035 = vsyncadd %s1027, 0
          %s1036 = smul.addr %s25, 16
          %s1037 = smul.addr %s1036, 8
          %s1038 = scalar_lea.hbm %s5, %s1037
          %s1039 = sshll.u32 %s1030, 4
          %s1040 = int_to_ptr.vmem [resolvable:$true] %s1039
          %s1041 = sshll.u32 %s1038, 4
          %s1042 = int_to_ptr.hbm [resolvable:$true] %s1041
          %1047 = dma.vmem_to_hbm [thread:$0]  %s1040, 2048, %s1042, %s1027, 128, 128, 8
        $region64: #{tpu_custom_call.1} parent=39 // pred_fallthru
          _
      $region40: #{tpu_custom_call.1} parent=5 // pred_fallthru
        _
      %p1048 = scmp.le.s32.totalorder 2, %s20
      // Predicated region
      $region65: #{tpu_custom_call.1} parent=5 // pred_check
        %p1049 = pneg %p1048
      $region66: #{tpu_custom_call.1} parent=5 // pred_check_branch
        %1051 = sbr.rel (%p1049) target = $region68
      $region67: #{tpu_custom_call.1} parent=5 // pred_region
        %s1052 = ssub.s32 %s20, 2
        // Predicated region
        $region69: #{tpu_custom_call.1} parent=67 // pred_check
          %p1053 = pneg %p159
        $region70: #{tpu_custom_call.1} parent=67 // pred_check_branch
          %1055 = sbr.rel (%p1053) target = $region72
        $region71: #{tpu_custom_call.1} parent=67 // pred_region
          %s1056 = sand.u32 %s144, 1
          %s1057 = scalar_lea.sflag [#allocation4], %s1056
          %s1058 = sand.u32 %s144, 1
          %s1059 = smul.addr %s1058, 128
          %s1060 = scalar_lea.vmem [#allocation12], %s1059
          %1062 = dma.done %s1057, 2048
        $region72: #{tpu_custom_call.1} parent=67 // pred_fallthru
          _
      $region68: #{tpu_custom_call.1} parent=5 // pred_fallthru
        _
    $region6: #{tpu_custom_call.1} parent=1 // loop_footer
      %s24 = sadd.s32 1, %s20
    $region7: #{tpu_custom_call.1} parent=1 // loop_footer_branch
      %19 = sbr.rel target = $region3
    $region8: #{tpu_custom_call.1} parent=1 // loop_exit
      _
    %1063 = vsyncpa [#allocation3], 1
    %s1064 = scalar_lea.sflag [#allocation3], 1
    %1065 = vsyncpa %s1064, 1
    %1066 = vsyncpa [#allocation4], 1
    %s1067 = scalar_lea.sflag [#allocation4], 1
    %1068 = vsyncpa %s1067, 1
    %1069 = vsyncpa [#allocation5], 1
    %s1070 = scalar_lea.sflag [#allocation5], 1
    %1071 = vsyncpa %s1070, 1
    %1072 = vsyncpa [#allocation8], 1
    %1073 = vsyncpa [#allocation11], 1

</llo_original>
